<compile_context>
chip_gen: v6e
topology: v6e:2x2x1
jax: 0.10.0
libtpu: 0.0.40
codegen_flags: <defaults>
</compile_context>

<pallas_src>
import functools

import jax
import jax.numpy as jnp
from jax import lax
from jax.experimental import pallas as pl
from jax.experimental.pallas import tpu as pltpu


# ----------------------------------------------------------------------------
# Fused kernel: per-head qkv projection + L2-norm attention + output projection
# ----------------------------------------------------------------------------
def _fused_attention_kernel(x_ref, wqkv_ref, wouth_ref, o_ref, *, B, N, H, Dh, scale):
    D = H * Dh

    x_bf = x_ref[...].astype(jnp.bfloat16)            # (B*N, D) MXU operand
    w_qkv = wqkv_ref[...]                              # (3D, D) bf16, PyTorch (out,in)

    def l2_normalize(t, mul=1.0):
        # F.normalize(dim=-1): t / clamp_min(||t||, 1e-12)
        #   == t * rsqrt(clamp_min(sum(t^2), 1e-24))   (EUP rsqrt, f32 math)
        ss = jnp.sum(t * t, axis=-1, keepdims=True)
        return t * (lax.rsqrt(jnp.maximum(ss, 1e-24)) * mul)

    def proj(lhs_bf, w_rows_bf):
        # lhs @ w_rows.T — contract both last dims so the weight is consumed
        # in its native (out, in) layout (no transpose / relayout op).
        return lax.dot_general(
            lhs_bf, w_rows_bf, (((1,), (1,)), ((), ())),
            preferred_element_type=jnp.float32,
        )

    # Fully unrolled over the tiny B*H heads; every slice below is static and
    # sublane-aligned (row offsets are multiples of 8).
    for b in range(B):
        xb = x_bf[b * N:(b + 1) * N, :]                # (N, D)
        out_b = jnp.zeros((N, D), jnp.float32)         # full-width accumulator
        for h in range(H):
            # Per-head weight ROW slices (replaces column-slicing fused qkv).
            wq = w_qkv[h * Dh:(h + 1) * Dh, :]                     # (Dh, D)
            wk = w_qkv[D + h * Dh:D + (h + 1) * Dh, :]             # (Dh, D)
            wv = w_qkv[2 * D + h * Dh:2 * D + (h + 1) * Dh, :]     # (Dh, D)

            q = proj(xb, wq)                           # (N, Dh) f32
            k = proj(xb, wk)                           # (N, Dh) f32
            v = proj(xb, wv)                           # (N, Dh) f32

            qn = l2_normalize(q, mul=scale)            # fold 1/sqrt(Dh) into q
            kn = l2_normalize(k)

            # dots[i, j] = qn[i] . kn[j]  (tiny matmul, kept in f32)
            dots = lax.dot_general(
                qn, kn, (((1,), (1,)), ((), ())),
                preferred_element_type=jnp.float32,
            )                                           # (N, N)

            # Softmax without max-subtraction: |dots| <= scale ~= 0.177.
            p = jnp.exp(dots)
            denom = jnp.sum(p, axis=-1, keepdims=True)
            attn = p * pl.reciprocal(denom, approx=True)

            av = jnp.dot(attn.astype(jnp.bfloat16), v.astype(jnp.bfloat16),
                         preferred_element_type=jnp.float32)        # (N, Dh)

            # Per-head output projection accumulated into the full-width slab
            # (no lane/sublane concatenates, no in-kernel w_out column slice).
            w_out_h = wouth_ref[h]                     # (D, Dh) bf16
            out_b = out_b + lax.dot_general(
                av.astype(jnp.bfloat16), w_out_h, (((1,), (1,)), ((), ())),
                preferred_element_type=jnp.float32,
            )                                           # (N, D)

        # One full-width store per batch row-block (8-aligned sublane rows).
        # D=64 < 128 lanes -> masked vst; accepted (relayout would cost more).
        o_ref[b * N:(b + 1) * N, :] = out_b.astype(o_ref.dtype)


# ----------------------------------------------------------------------------
# Wrapper: single fused, gridless pallas_call (whole problem fits in VMEM)
# ----------------------------------------------------------------------------
@functools.partial(jax.jit, static_argnames=("dim_heads",))
def attention_forward(x, w_qkv, w_out, dim_heads):
    B, N, D = x.shape
    H = D // dim_heads
    Dh = dim_heads
    scale = 1.0 / (Dh ** 0.5)

    # bf16 weights: halves weight HBM->VMEM DMA; accumulation stays f32.
    w_qkv_bf = w_qkv.astype(jnp.bfloat16)                         # (3D, D)
    # Pre-split to_out weight into per-head column blocks OUTSIDE the kernel
    # (avoids mid-tile lane slices of w_out in-kernel): (D, D) -> (H, D, Dh).
    w_out_heads = w_out.reshape(D, H, Dh).transpose(1, 0, 2).astype(jnp.bfloat16)

    kernel = functools.partial(
        _fused_attention_kernel, B=B, N=N, H=H, Dh=Dh, scale=scale
    )

    vmem = pltpu.MemorySpace.VMEM
    out2d = pl.pallas_call(
        kernel,
        out_shape=jax.ShapeDtypeStruct((B * N, D), x.dtype),
        in_specs=[
            pl.BlockSpec(memory_space=vmem),   # x       (B*N, D)
            pl.BlockSpec(memory_space=vmem),   # w_qkv   (3D, D)
            pl.BlockSpec(memory_space=vmem),   # w_out   (H, D, Dh)
        ],
        out_specs=pl.BlockSpec(memory_space=vmem),
    )(x.reshape(B * N, D), w_qkv_bf, w_out_heads)

    return out2d.reshape(B, N, D)


# ----------------------------------------------------------------------------
# Pure-JAX reference for verification (PyTorch semantics, f32 throughout)
# ----------------------------------------------------------------------------
def attention_reference(x, w_qkv, w_out, dim_heads):
    B, N, D = x.shape
    H = D // dim_heads
    qkv = x @ w_qkv.T
    q, k, v = jnp.split(qkv, 3, axis=-1)

    def to_heads(t):
        return t.reshape(B, N, H, dim_heads).transpose(0, 2, 1, 3)

    q, k, v = map(to_heads, (q, k, v))
    q = q / jnp.maximum(jnp.linalg.norm(q, axis=-1, keepdims=True), 1e-12)
    k = k / jnp.maximum(jnp.linalg.norm(k, axis=-1, keepdims=True), 1e-12)
    scale = 1.0 / (dim_heads ** 0.5)
    dots = jnp.einsum("bhid,bhjd->bhij", q, k) * scale
    attn = jax.nn.softmax(dots.astype(jnp.float32), axis=-1)
    out = jnp.einsum("bhij,bhjd->bhid", attn, v)
    out = out.transpose(0, 2, 1, 3).reshape(B, N, D)
    return out @ w_out.T


if __name__ == "__main__":
    B, N, D = 2, 8, 64
    dim_heads = 32  # -> num_heads = 2

    key = jax.random.PRNGKey(0)
    kx, kqkv, kout = jax.random.split(key, 3)

    x = jax.random.normal(kx, (B, N, D), dtype=jnp.float32)
    # nn.Linear(dim, dim*3, bias=False): weight shape (3D, D)
    w_qkv = 0.02 * jax.random.normal(kqkv, (3 * D, D), dtype=jnp.float32)
    # nn.Linear(dim, dim, bias=False): weight shape (D, D)
    # (zero_init_output=False chosen so the kernel output is non-trivial)
    w_out = 0.02 * jax.random.normal(kout, (D, D), dtype=jnp.float32)

    out = attention_forward(x, w_qkv, w_out, dim_heads)
    out = jax.block_until_ready(out)

    ref = attention_reference(x, w_qkv, w_out, dim_heads)
    assert out.shape == (B, N, D)
    # Tolerance accounts for bf16 MXU operands (f32 accumulation) and the EUP
    # approximate reciprocal in the softmax, per the performance review.
    assert jnp.allclose(out, ref, atol=2e-3, rtol=1e-2), "mismatch vs reference"

    print("KERNEL_OK")
</pallas_src>

<mosaic_0001>
module attributes {stable_mosaic.version = 11 : i64} {
  func.func @_fused_attention_kernel(%arg0: memref<16x64xf32, #tpu.memory_space<vmem>>, %arg1: memref<192x64xbf16, #tpu.memory_space<vmem>>, %arg2: memref<2x64x32xbf16, #tpu.memory_space<vmem>>, %arg3: memref<16x64xf32, #tpu.memory_space<vmem>>) attributes {dimension_semantics = [], scalar_prefetch = 0 : i64, scratch_operands = 0 : i64, tpu.core_type = #tpu.core_type<tc>} {
    %c0 = arith.constant 0 : index
    %c0_0 = arith.constant 0 : index
    %0 = vector.load %arg0[%c0, %c0_0] : memref<16x64xf32, #tpu.memory_space<vmem>>, vector<16x64xf32>
    %1 = arith.truncf %0 : vector<16x64xf32> to vector<16x64xbf16>
    %c0_1 = arith.constant 0 : index
    %c0_2 = arith.constant 0 : index
    %2 = vector.load %arg1[%c0_1, %c0_2] : memref<192x64xbf16, #tpu.memory_space<vmem>>, vector<192x64xbf16>
    %3 = vector.extract_strided_slice %1 {offsets = [0, 0], sizes = [8, 64], strides = [1, 1]} : vector<16x64xbf16> to vector<8x64xbf16>
    %cst = arith.constant 0.000000e+00 : f32
    %4 = vector.broadcast %cst : f32 to vector<8x64xf32>
    %5 = vector.extract_strided_slice %2 {offsets = [0, 0], sizes = [32, 64], strides = [1, 1]} : vector<192x64xbf16> to vector<32x64xbf16>
    %6 = vector.extract_strided_slice %2 {offsets = [64, 0], sizes = [32, 64], strides = [1, 1]} : vector<192x64xbf16> to vector<32x64xbf16>
    %7 = vector.extract_strided_slice %2 {offsets = [128, 0], sizes = [32, 64], strides = [1, 1]} : vector<192x64xbf16> to vector<32x64xbf16>
    %cst_3 = arith.constant dense<0.000000e+00> : vector<8x32xf32>
    %8 = tpu.matmul %3, %5, %cst_3 {dimension_numbers = #tpu.dot_dimension_numbers<[1], [1], [0], [0], [0, 0, 1, 0], [], []>} : vector<8x64xbf16>, vector<32x64xbf16>, vector<8x32xf32> -> vector<8x32xf32>
    %cst_4 = arith.constant dense<0.000000e+00> : vector<8x32xf32>
    %9 = tpu.matmul %3, %6, %cst_4 {dimension_numbers = #tpu.dot_dimension_numbers<[1], [1], [0], [0], [0, 0, 1, 0], [], []>} : vector<8x64xbf16>, vector<32x64xbf16>, vector<8x32xf32> -> vector<8x32xf32>
    %cst_5 = arith.constant dense<0.000000e+00> : vector<8x32xf32>
    %10 = tpu.matmul %3, %7, %cst_5 {dimension_numbers = #tpu.dot_dimension_numbers<[1], [1], [0], [0], [0, 0, 1, 0], [], []>} : vector<8x64xbf16>, vector<32x64xbf16>, vector<8x32xf32> -> vector<8x32xf32>
    %11 = arith.mulf %8, %8 : vector<8x32xf32>
    %cst_6 = arith.constant dense<0.000000e+00> : vector<8xf32>
    %12 = vector.multi_reduction <add>, %11, %cst_6 [1] : vector<8x32xf32> to vector<8xf32>
    %13 = vector.shape_cast %12 : vector<8xf32> to vector<8x1xf32>
    %cst_7 = arith.constant 1.000000e-24 : f32
    %14 = vector.broadcast %cst_7 : f32 to vector<8x1xf32>
    %15 = arith.maximumf %13, %14 : vector<8x1xf32>
    %16 = math.rsqrt %15 : vector<8x1xf32>
    %cst_8 = arith.constant 0.176776692 : f32
    %17 = vector.broadcast %cst_8 : f32 to vector<8x1xf32>
    %18 = arith.mulf %16, %17 : vector<8x1xf32>
    %19 = vector.broadcast %18 : vector<8x1xf32> to vector<8x32xf32>
    %20 = arith.mulf %8, %19 : vector<8x32xf32>
    %21 = arith.mulf %9, %9 : vector<8x32xf32>
    %cst_9 = arith.constant dense<0.000000e+00> : vector<8xf32>
    %22 = vector.multi_reduction <add>, %21, %cst_9 [1] : vector<8x32xf32> to vector<8xf32>
    %23 = vector.shape_cast %22 : vector<8xf32> to vector<8x1xf32>
    %cst_10 = arith.constant 1.000000e-24 : f32
    %24 = vector.broadcast %cst_10 : f32 to vector<8x1xf32>
    %25 = arith.maximumf %23, %24 : vector<8x1xf32>
    %26 = math.rsqrt %25 : vector<8x1xf32>
    %cst_11 = arith.constant 1.000000e+00 : f32
    %27 = vector.broadcast %cst_11 : f32 to vector<8x1xf32>
    %28 = arith.mulf %26, %27 : vector<8x1xf32>
    %29 = vector.broadcast %28 : vector<8x1xf32> to vector<8x32xf32>
    %30 = arith.mulf %9, %29 : vector<8x32xf32>
    %cst_12 = arith.constant dense<0.000000e+00> : vector<8x8xf32>
    %31 = tpu.matmul %20, %30, %cst_12 {dimension_numbers = #tpu.dot_dimension_numbers<[1], [1], [0], [0], [0, 0, 1, 0], [], []>} : vector<8x32xf32>, vector<8x32xf32>, vector<8x8xf32> -> vector<8x8xf32>
    %32 = math.exp %31 : vector<8x8xf32>
    %cst_13 = arith.constant dense<0.000000e+00> : vector<8xf32>
    %33 = vector.multi_reduction <add>, %32, %cst_13 [1] : vector<8x8xf32> to vector<8xf32>
    %34 = vector.shape_cast %33 : vector<8xf32> to vector<8x1xf32>
    %35 = tpu.reciprocal %34 {approx = true} : vector<8x1xf32> -> vector<8x1xf32>
    %36 = vector.broadcast %35 : vector<8x1xf32> to vector<8x8xf32>
    %37 = arith.mulf %32, %36 : vector<8x8xf32>
    %38 = arith.truncf %37 : vector<8x8xf32> to vector<8x8xbf16>
    %39 = arith.truncf %10 : vector<8x32xf32> to vector<8x32xbf16>
    %cst_14 = arith.constant dense<0.000000e+00> : vector<8x32xf32>
    %40 = tpu.matmul %38, %39, %cst_14 {dimension_numbers = #tpu.dot_dimension_numbers<[1], [0], [0], [1], [0, 0, 1, 1], [], []>} : vector<8x8xbf16>, vector<8x32xbf16>, vector<8x32xf32> -> vector<8x32xf32>
    %c0_15 = arith.constant 0 : index
    %c0_16 = arith.constant 0 : index
    %c0_17 = arith.constant 0 : index
    %41 = vector.load %arg2[%c0_15, %c0_16, %c0_17] : memref<2x64x32xbf16, #tpu.memory_space<vmem>>, vector<1x64x32xbf16>
    %42 = vector.shape_cast %41 : vector<1x64x32xbf16> to vector<64x32xbf16>
    %43 = arith.truncf %40 : vector<8x32xf32> to vector<8x32xbf16>
    %cst_18 = arith.constant dense<0.000000e+00> : vector<8x64xf32>
    %44 = tpu.matmul %43, %42, %cst_18 {dimension_numbers = #tpu.dot_dimension_numbers<[1], [1], [0], [0], [0, 0, 1, 0], [], []>} : vector<8x32xbf16>, vector<64x32xbf16>, vector<8x64xf32> -> vector<8x64xf32>
    %45 = arith.addf %4, %44 : vector<8x64xf32>
    %46 = vector.extract_strided_slice %2 {offsets = [32, 0], sizes = [32, 64], strides = [1, 1]} : vector<192x64xbf16> to vector<32x64xbf16>
    %47 = vector.extract_strided_slice %2 {offsets = [96, 0], sizes = [32, 64], strides = [1, 1]} : vector<192x64xbf16> to vector<32x64xbf16>
    %48 = vector.extract_strided_slice %2 {offsets = [160, 0], sizes = [32, 64], strides = [1, 1]} : vector<192x64xbf16> to vector<32x64xbf16>
    %cst_19 = arith.constant dense<0.000000e+00> : vector<8x32xf32>
    %49 = tpu.matmul %3, %46, %cst_19 {dimension_numbers = #tpu.dot_dimension_numbers<[1], [1], [0], [0], [0, 0, 1, 0], [], []>} : vector<8x64xbf16>, vector<32x64xbf16>, vector<8x32xf32> -> vector<8x32xf32>
    %cst_20 = arith.constant dense<0.000000e+00> : vector<8x32xf32>
    %50 = tpu.matmul %3, %47, %cst_20 {dimension_numbers = #tpu.dot_dimension_numbers<[1], [1], [0], [0], [0, 0, 1, 0], [], []>} : vector<8x64xbf16>, vector<32x64xbf16>, vector<8x32xf32> -> vector<8x32xf32>
    %cst_21 = arith.constant dense<0.000000e+00> : vector<8x32xf32>
    %51 = tpu.matmul %3, %48, %cst_21 {dimension_numbers = #tpu.dot_dimension_numbers<[1], [1], [0], [0], [0, 0, 1, 0], [], []>} : vector<8x64xbf16>, vector<32x64xbf16>, vector<8x32xf32> -> vector<8x32xf32>
    %52 = arith.mulf %49, %49 : vector<8x32xf32>
    %cst_22 = arith.constant dense<0.000000e+00> : vector<8xf32>
    %53 = vector.multi_reduction <add>, %52, %cst_22 [1] : vector<8x32xf32> to vector<8xf32>
    %54 = vector.shape_cast %53 : vector<8xf32> to vector<8x1xf32>
    %cst_23 = arith.constant 1.000000e-24 : f32
    %55 = vector.broadcast %cst_23 : f32 to vector<8x1xf32>
    %56 = arith.maximumf %54, %55 : vector<8x1xf32>
    %57 = math.rsqrt %56 : vector<8x1xf32>
    %cst_24 = arith.constant 0.176776692 : f32
    %58 = vector.broadcast %cst_24 : f32 to vector<8x1xf32>
    %59 = arith.mulf %57, %58 : vector<8x1xf32>
    %60 = vector.broadcast %59 : vector<8x1xf32> to vector<8x32xf32>
    %61 = arith.mulf %49, %60 : vector<8x32xf32>
    %62 = arith.mulf %50, %50 : vector<8x32xf32>
    %cst_25 = arith.constant dense<0.000000e+00> : vector<8xf32>
    %63 = vector.multi_reduction <add>, %62, %cst_25 [1] : vector<8x32xf32> to vector<8xf32>
    %64 = vector.shape_cast %63 : vector<8xf32> to vector<8x1xf32>
    %cst_26 = arith.constant 1.000000e-24 : f32
    %65 = vector.broadcast %cst_26 : f32 to vector<8x1xf32>
    %66 = arith.maximumf %64, %65 : vector<8x1xf32>
    %67 = math.rsqrt %66 : vector<8x1xf32>
    %cst_27 = arith.constant 1.000000e+00 : f32
    %68 = vector.broadcast %cst_27 : f32 to vector<8x1xf32>
    %69 = arith.mulf %67, %68 : vector<8x1xf32>
    %70 = vector.broadcast %69 : vector<8x1xf32> to vector<8x32xf32>
    %71 = arith.mulf %50, %70 : vector<8x32xf32>
    %cst_28 = arith.constant dense<0.000000e+00> : vector<8x8xf32>
    %72 = tpu.matmul %61, %71, %cst_28 {dimension_numbers = #tpu.dot_dimension_numbers<[1], [1], [0], [0], [0, 0, 1, 0], [], []>} : vector<8x32xf32>, vector<8x32xf32>, vector<8x8xf32> -> vector<8x8xf32>
    %73 = math.exp %72 : vector<8x8xf32>
    %cst_29 = arith.constant dense<0.000000e+00> : vector<8xf32>
    %74 = vector.multi_reduction <add>, %73, %cst_29 [1] : vector<8x8xf32> to vector<8xf32>
    %75 = vector.shape_cast %74 : vector<8xf32> to vector<8x1xf32>
    %76 = tpu.reciprocal %75 {approx = true} : vector<8x1xf32> -> vector<8x1xf32>
    %77 = vector.broadcast %76 : vector<8x1xf32> to vector<8x8xf32>
    %78 = arith.mulf %73, %77 : vector<8x8xf32>
    %79 = arith.truncf %78 : vector<8x8xf32> to vector<8x8xbf16>
    %80 = arith.truncf %51 : vector<8x32xf32> to vector<8x32xbf16>
    %cst_30 = arith.constant dense<0.000000e+00> : vector<8x32xf32>
    %81 = tpu.matmul %79, %80, %cst_30 {dimension_numbers = #tpu.dot_dimension_numbers<[1], [0], [0], [1], [0, 0, 1, 1], [], []>} : vector<8x8xbf16>, vector<8x32xbf16>, vector<8x32xf32> -> vector<8x32xf32>
    %c1 = arith.constant 1 : index
    %c0_31 = arith.constant 0 : index
    %c0_32 = arith.constant 0 : index
    %82 = vector.load %arg2[%c1, %c0_31, %c0_32] : memref<2x64x32xbf16, #tpu.memory_space<vmem>>, vector<1x64x32xbf16>
    %83 = vector.shape_cast %82 : vector<1x64x32xbf16> to vector<64x32xbf16>
    %84 = arith.truncf %81 : vector<8x32xf32> to vector<8x32xbf16>
    %cst_33 = arith.constant dense<0.000000e+00> : vector<8x64xf32>
    %85 = tpu.matmul %84, %83, %cst_33 {dimension_numbers = #tpu.dot_dimension_numbers<[1], [1], [0], [0], [0, 0, 1, 0], [], []>} : vector<8x32xbf16>, vector<64x32xbf16>, vector<8x64xf32> -> vector<8x64xf32>
    %86 = arith.addf %45, %85 : vector<8x64xf32>
    %c0_34 = arith.constant 0 : index
    %c0_35 = arith.constant 0 : index
    %87 = vector.load %arg3[%c0_34, %c0_35] : memref<16x64xf32, #tpu.memory_space<vmem>>, vector<8x64xf32>
    tpu.vector_store %arg3[%c0_34, %c0_35], %86 {strides = array<i32>} : memref<16x64xf32, #tpu.memory_space<vmem>>, vector<8x64xf32>,
    %88 = vector.extract_strided_slice %1 {offsets = [8, 0], sizes = [8, 64], strides = [1, 1]} : vector<16x64xbf16> to vector<8x64xbf16>
    %cst_36 = arith.constant 0.000000e+00 : f32
    %89 = vector.broadcast %cst_36 : f32 to vector<8x64xf32>
    %90 = vector.extract_strided_slice %2 {offsets = [0, 0], sizes = [32, 64], strides = [1, 1]} : vector<192x64xbf16> to vector<32x64xbf16>
    %91 = vector.extract_strided_slice %2 {offsets = [64, 0], sizes = [32, 64], strides = [1, 1]} : vector<192x64xbf16> to vector<32x64xbf16>
    %92 = vector.extract_strided_slice %2 {offsets = [128, 0], sizes = [32, 64], strides = [1, 1]} : vector<192x64xbf16> to vector<32x64xbf16>
    %cst_37 = arith.constant dense<0.000000e+00> : vector<8x32xf32>
    %93 = tpu.matmul %88, %90, %cst_37 {dimension_numbers = #tpu.dot_dimension_numbers<[1], [1], [0], [0], [0, 0, 1, 0], [], []>} : vector<8x64xbf16>, vector<32x64xbf16>, vector<8x32xf32> -> vector<8x32xf32>
    %cst_38 = arith.constant dense<0.000000e+00> : vector<8x32xf32>
    %94 = tpu.matmul %88, %91, %cst_38 {dimension_numbers = #tpu.dot_dimension_numbers<[1], [1], [0], [0], [0, 0, 1, 0], [], []>} : vector<8x64xbf16>, vector<32x64xbf16>, vector<8x32xf32> -> vector<8x32xf32>
    %cst_39 = arith.constant dense<0.000000e+00> : vector<8x32xf32>
    %95 = tpu.matmul %88, %92, %cst_39 {dimension_numbers = #tpu.dot_dimension_numbers<[1], [1], [0], [0], [0, 0, 1, 0], [], []>} : vector<8x64xbf16>, vector<32x64xbf16>, vector<8x32xf32> -> vector<8x32xf32>
    %96 = arith.mulf %93, %93 : vector<8x32xf32>
    %cst_40 = arith.constant dense<0.000000e+00> : vector<8xf32>
    %97 = vector.multi_reduction <add>, %96, %cst_40 [1] : vector<8x32xf32> to vector<8xf32>
    %98 = vector.shape_cast %97 : vector<8xf32> to vector<8x1xf32>
    %cst_41 = arith.constant 1.000000e-24 : f32
    %99 = vector.broadcast %cst_41 : f32 to vector<8x1xf32>
    %100 = arith.maximumf %98, %99 : vector<8x1xf32>
    %101 = math.rsqrt %100 : vector<8x1xf32>
    %cst_42 = arith.constant 0.176776692 : f32
    %102 = vector.broadcast %cst_42 : f32 to vector<8x1xf32>
    %103 = arith.mulf %101, %102 : vector<8x1xf32>
    %104 = vector.broadcast %103 : vector<8x1xf32> to vector<8x32xf32>
    %105 = arith.mulf %93, %104 : vector<8x32xf32>
    %106 = arith.mulf %94, %94 : vector<8x32xf32>
    %cst_43 = arith.constant dense<0.000000e+00> : vector<8xf32>
    %107 = vector.multi_reduction <add>, %106, %cst_43 [1] : vector<8x32xf32> to vector<8xf32>
    %108 = vector.shape_cast %107 : vector<8xf32> to vector<8x1xf32>
    %cst_44 = arith.constant 1.000000e-24 : f32
    %109 = vector.broadcast %cst_44 : f32 to vector<8x1xf32>
    %110 = arith.maximumf %108, %109 : vector<8x1xf32>
    %111 = math.rsqrt %110 : vector<8x1xf32>
    %cst_45 = arith.constant 1.000000e+00 : f32
    %112 = vector.broadcast %cst_45 : f32 to vector<8x1xf32>
    %113 = arith.mulf %111, %112 : vector<8x1xf32>
    %114 = vector.broadcast %113 : vector<8x1xf32> to vector<8x32xf32>
    %115 = arith.mulf %94, %114 : vector<8x32xf32>
    %cst_46 = arith.constant dense<0.000000e+00> : vector<8x8xf32>
    %116 = tpu.matmul %105, %115, %cst_46 {dimension_numbers = #tpu.dot_dimension_numbers<[1], [1], [0], [0], [0, 0, 1, 0], [], []>} : vector<8x32xf32>, vector<8x32xf32>, vector<8x8xf32> -> vector<8x8xf32>
    %117 = math.exp %116 : vector<8x8xf32>
    %cst_47 = arith.constant dense<0.000000e+00> : vector<8xf32>
    %118 = vector.multi_reduction <add>, %117, %cst_47 [1] : vector<8x8xf32> to vector<8xf32>
    %119 = vector.shape_cast %118 : vector<8xf32> to vector<8x1xf32>
    %120 = tpu.reciprocal %119 {approx = true} : vector<8x1xf32> -> vector<8x1xf32>
    %121 = vector.broadcast %120 : vector<8x1xf32> to vector<8x8xf32>
    %122 = arith.mulf %117, %121 : vector<8x8xf32>
    %123 = arith.truncf %122 : vector<8x8xf32> to vector<8x8xbf16>
    %124 = arith.truncf %95 : vector<8x32xf32> to vector<8x32xbf16>
    %cst_48 = arith.constant dense<0.000000e+00> : vector<8x32xf32>
    %125 = tpu.matmul %123, %124, %cst_48 {dimension_numbers = #tpu.dot_dimension_numbers<[1], [0], [0], [1], [0, 0, 1, 1], [], []>} : vector<8x8xbf16>, vector<8x32xbf16>, vector<8x32xf32> -> vector<8x32xf32>
    %c0_49 = arith.constant 0 : index
    %c0_50 = arith.constant 0 : index
    %c0_51 = arith.constant 0 : index
    %126 = vector.load %arg2[%c0_49, %c0_50, %c0_51] : memref<2x64x32xbf16, #tpu.memory_space<vmem>>, vector<1x64x32xbf16>
    %127 = vector.shape_cast %126 : vector<1x64x32xbf16> to vector<64x32xbf16>
    %128 = arith.truncf %125 : vector<8x32xf32> to vector<8x32xbf16>
    %cst_52 = arith.constant dense<0.000000e+00> : vector<8x64xf32>
    %129 = tpu.matmul %128, %127, %cst_52 {dimension_numbers = #tpu.dot_dimension_numbers<[1], [1], [0], [0], [0, 0, 1, 0], [], []>} : vector<8x32xbf16>, vector<64x32xbf16>, vector<8x64xf32> -> vector<8x64xf32>
    %130 = arith.addf %89, %129 : vector<8x64xf32>
    %131 = vector.extract_strided_slice %2 {offsets = [32, 0], sizes = [32, 64], strides = [1, 1]} : vector<192x64xbf16> to vector<32x64xbf16>
    %132 = vector.extract_strided_slice %2 {offsets = [96, 0], sizes = [32, 64], strides = [1, 1]} : vector<192x64xbf16> to vector<32x64xbf16>
    %133 = vector.extract_strided_slice %2 {offsets = [160, 0], sizes = [32, 64], strides = [1, 1]} : vector<192x64xbf16> to vector<32x64xbf16>
    %cst_53 = arith.constant dense<0.000000e+00> : vector<8x32xf32>
    %134 = tpu.matmul %88, %131, %cst_53 {dimension_numbers = #tpu.dot_dimension_numbers<[1], [1], [0], [0], [0, 0, 1, 0], [], []>} : vector<8x64xbf16>, vector<32x64xbf16>, vector<8x32xf32> -> vector<8x32xf32>
    %cst_54 = arith.constant dense<0.000000e+00> : vector<8x32xf32>
    %135 = tpu.matmul %88, %132, %cst_54 {dimension_numbers = #tpu.dot_dimension_numbers<[1], [1], [0], [0], [0, 0, 1, 0], [], []>} : vector<8x64xbf16>, vector<32x64xbf16>, vector<8x32xf32> -> vector<8x32xf32>
    %cst_55 = arith.constant dense<0.000000e+00> : vector<8x32xf32>
    %136 = tpu.matmul %88, %133, %cst_55 {dimension_numbers = #tpu.dot_dimension_numbers<[1], [1], [0], [0], [0, 0, 1, 0], [], []>} : vector<8x64xbf16>, vector<32x64xbf16>, vector<8x32xf32> -> vector<8x32xf32>
    %137 = arith.mulf %134, %134 : vector<8x32xf32>
    %cst_56 = arith.constant dense<0.000000e+00> : vector<8xf32>
    %138 = vector.multi_reduction <add>, %137, %cst_56 [1] : vector<8x32xf32> to vector<8xf32>
    %139 = vector.shape_cast %138 : vector<8xf32> to vector<8x1xf32>
    %cst_57 = arith.constant 1.000000e-24 : f32
    %140 = vector.broadcast %cst_57 : f32 to vector<8x1xf32>
    %141 = arith.maximumf %139, %140 : vector<8x1xf32>
    %142 = math.rsqrt %141 : vector<8x1xf32>
    %cst_58 = arith.constant 0.176776692 : f32
    %143 = vector.broadcast %cst_58 : f32 to vector<8x1xf32>
    %144 = arith.mulf %142, %143 : vector<8x1xf32>
    %145 = vector.broadcast %144 : vector<8x1xf32> to vector<8x32xf32>
    %146 = arith.mulf %134, %145 : vector<8x32xf32>
    %147 = arith.mulf %135, %135 : vector<8x32xf32>
    %cst_59 = arith.constant dense<0.000000e+00> : vector<8xf32>
    %148 = vector.multi_reduction <add>, %147, %cst_59 [1] : vector<8x32xf32> to vector<8xf32>
    %149 = vector.shape_cast %148 : vector<8xf32> to vector<8x1xf32>
    %cst_60 = arith.constant 1.000000e-24 : f32
    %150 = vector.broadcast %cst_60 : f32 to vector<8x1xf32>
    %151 = arith.maximumf %149, %150 : vector<8x1xf32>
    %152 = math.rsqrt %151 : vector<8x1xf32>
    %cst_61 = arith.constant 1.000000e+00 : f32
    %153 = vector.broadcast %cst_61 : f32 to vector<8x1xf32>
    %154 = arith.mulf %152, %153 : vector<8x1xf32>
    %155 = vector.broadcast %154 : vector<8x1xf32> to vector<8x32xf32>
    %156 = arith.mulf %135, %155 : vector<8x32xf32>
    %cst_62 = arith.constant dense<0.000000e+00> : vector<8x8xf32>
    %157 = tpu.matmul %146, %156, %cst_62 {dimension_numbers = #tpu.dot_dimension_numbers<[1], [1], [0], [0], [0, 0, 1, 0], [], []>} : vector<8x32xf32>, vector<8x32xf32>, vector<8x8xf32> -> vector<8x8xf32>
    %158 = math.exp %157 : vector<8x8xf32>
    %cst_63 = arith.constant dense<0.000000e+00> : vector<8xf32>
    %159 = vector.multi_reduction <add>, %158, %cst_63 [1] : vector<8x8xf32> to vector<8xf32>
    %160 = vector.shape_cast %159 : vector<8xf32> to vector<8x1xf32>
    %161 = tpu.reciprocal %160 {approx = true} : vector<8x1xf32> -> vector<8x1xf32>
    %162 = vector.broadcast %161 : vector<8x1xf32> to vector<8x8xf32>
    %163 = arith.mulf %158, %162 : vector<8x8xf32>
    %164 = arith.truncf %163 : vector<8x8xf32> to vector<8x8xbf16>
    %165 = arith.truncf %136 : vector<8x32xf32> to vector<8x32xbf16>
    %cst_64 = arith.constant dense<0.000000e+00> : vector<8x32xf32>
    %166 = tpu.matmul %164, %165, %cst_64 {dimension_numbers = #tpu.dot_dimension_numbers<[1], [0], [0], [1], [0, 0, 1, 1], [], []>} : vector<8x8xbf16>, vector<8x32xbf16>, vector<8x32xf32> -> vector<8x32xf32>
    %c1_65 = arith.constant 1 : index
    %c0_66 = arith.constant 0 : index
    %c0_67 = arith.constant 0 : index
    %167 = vector.load %arg2[%c1_65, %c0_66, %c0_67] : memref<2x64x32xbf16, #tpu.memory_space<vmem>>, vector<1x64x32xbf16>
    %168 = vector.shape_cast %167 : vector<1x64x32xbf16> to vector<64x32xbf16>
    %169 = arith.truncf %166 : vector<8x32xf32> to vector<8x32xbf16>
    %cst_68 = arith.constant dense<0.000000e+00> : vector<8x64xf32>
    %170 = tpu.matmul %169, %168, %cst_68 {dimension_numbers = #tpu.dot_dimension_numbers<[1], [1], [0], [0], [0, 0, 1, 0], [], []>} : vector<8x32xbf16>, vector<64x32xbf16>, vector<8x64xf32> -> vector<8x64xf32>
    %171 = arith.addf %130, %170 : vector<8x64xf32>
    %c8 = arith.constant 8 : index
    %c0_69 = arith.constant 0 : index
    %172 = vector.load %arg3[%c8, %c0_69] : memref<16x64xf32, #tpu.memory_space<vmem>>, vector<8x64xf32>
    tpu.vector_store %arg3[%c8, %c0_69], %171 {strides = array<i32>} : memref<16x64xf32, #tpu.memory_space<vmem>>, vector<8x64xf32>,
    return
  }
}

</mosaic_0001>

<llo_original>
// kernel: attention_forward.1
$region0: #{attention_forward.1}
  #allocation0 [shape = 'u32[]', space=smem, size = 0x4, offset = 0x4, fixed_abs, tag = 'smem constant byte address 0x4 - core index']
  #allocation1 [shape = 'u32[144,128]{1,0:T(1,128)}', space=vmem, size = 0x12000, scoped, tag = 'internal scratch']
  %s0 = inlined_call_operand.vmem [shape: f32[16,64], index: 0, kind: input, shape index: {}]
  %s1 = inlined_call_operand.vmem [shape: bf16[192,64], index: 1, kind: input, shape index: {}]
  %s2 = inlined_call_operand.vmem [shape: bf16[2,64,32], index: 2, kind: input, shape index: {}]
  %s3 = inlined_call_operand.hbm [shape: f32[16,64], index: 3, kind: output, shape index: {}]
  %s4 = sld [smem:[#allocation0]]
  $region22: #{attention_forward.1} parent=0
    _
  %s6 = ssub.s32 1, %s4
  %s7 = scalar_select 0, %s6, %s4
  $region1: #{attention_forward.1} parent=0
    #allocation2 [shape = 'u8[8192]{0}', space=vmem, size = 0x2000, scoped, tag = 'output window, operand 0, single buffered']
    #allocation3 [shape = 's32[1]{0}', space=sflag, size = 0x4, scoped, tag = 'scoped memory for attention_forward.1']
    %8 = vsyncpa [#allocation3], 0
    // Predicated region
    $region2: #{attention_forward.1} parent=1 // pred_check
      _
    $region3: #{attention_forward.1} parent=1 // pred_check_branch
      %10 = sbr.rel (0) target = $region5
    $region4: #{attention_forward.1} parent=1 // pred_region
      _
    $region5: #{attention_forward.1} parent=1 // pred_fallthru
      _
    // Predicated region
    $region6: #{attention_forward.1} parent=1 // pred_check
      _
    $region7: #{attention_forward.1} parent=1 // pred_check_branch
      %12 = sbr.rel (0) target = $region9
    $region8: #{attention_forward.1} parent=1 // pred_region
      _
    $region9: #{attention_forward.1} parent=1 // pred_fallthru
      _
    // Predicated region
    $region10: #{attention_forward.1} parent=1 // pred_check
      _
    $region11: #{attention_forward.1} parent=1 // pred_check_branch
      %14 = sbr.rel (0) target = $region13
    $region12: #{attention_forward.1} parent=1 // pred_region
      _
    $region13: #{attention_forward.1} parent=1 // pred_fallthru
      _
    %v16 = vld [vmem:[%s0] sm:$0xff]
    %v17 = vld [vmem:[%s0 + $0x8] sm:$0xff]
    %v18 = vpack.c.bf16 %v17, %v16
    %v19 = vld [vmem:[%s1] sm:$0xf]
    %v20 = vld [vmem:[%s1 + $0x4] sm:$0xf]
    %v21 = vld [vmem:[%s1 + $0x8] sm:$0xf]
    %v22 = vld [vmem:[%s1 + $0xc] sm:$0xf]
    %v23 = vld [vmem:[%s1 + $0x10] sm:$0xf]
    %v24 = vld [vmem:[%s1 + $0x14] sm:$0xf]
    %v25 = vld [vmem:[%s1 + $0x18] sm:$0xf]
    %v26 = vld [vmem:[%s1 + $0x1c] sm:$0xf]
    %v27 = vld [vmem:[%s1 + $0x20] sm:$0xf]
    %v28 = vld [vmem:[%s1 + $0x24] sm:$0xf]
    %v29 = vld [vmem:[%s1 + $0x28] sm:$0xf]
    %v30 = vld [vmem:[%s1 + $0x2c] sm:$0xf]
    %v31 = vld [vmem:[%s1 + $0x30] sm:$0xf]
    %v32 = vld [vmem:[%s1 + $0x34] sm:$0xf]
    %v33 = vld [vmem:[%s1 + $0x38] sm:$0xf]
    %v34 = vld [vmem:[%s1 + $0x3c] sm:$0xf]
    %v35 = vld [vmem:[%s1 + $0x40] sm:$0xf]
    %v36 = vld [vmem:[%s1 + $0x44] sm:$0xf]
    %v37 = vld [vmem:[%s1 + $0x48] sm:$0xf]
    %v38 = vld [vmem:[%s1 + $0x4c] sm:$0xf]
    %v39 = vld [vmem:[%s1 + $0x50] sm:$0xf]
    %v40 = vld [vmem:[%s1 + $0x54] sm:$0xf]
    %v41 = vld [vmem:[%s1 + $0x58] sm:$0xf]
    %v42 = vld [vmem:[%s1 + $0x5c] sm:$0xf]
    %v47 = vunpack.c.l.b16 %v19
    %v48 = vunpack.c.l.b16 %v20
    %v49 = vunpack.c.l.b16 %v21
    %v50 = vunpack.c.l.b16 %v22
    %v51 = vpack.c.b16 %v48, %v47
    %v52 = vpack.c.b16 %v50, %v49
    %vm53 = vcmask 523264
    %v55 = vsel %vm53, %v18, 0
    %v58 = vsel %vm53, %v51, 0
    %v61 = vsel %vm53, %v52, 0
    %63 = vmatprep.subr.bf16.mxu0 0
    %64 = vmatpush1.bf16.xpose.msra.mxu0 0
    %65 = vmatprep.subr.bf16.mxu0 0
    %66 = vmatpush1.bf16.xpose.msra.mxu0 0
    %67 = vmatprep.subr.bf16.mxu0 0
    %68 = vmatpush1.bf16.xpose.msra.mxu0 0
    %69 = vmatprep.subr.bf16.mxu0 0
    %70 = vmatpush1.bf16.xpose.msra.mxu0 0
    %71 = vmatprep.subr.bf16.mxu0 0
    %72 = vmatpush1.bf16.xpose.msra.mxu0 0
    %73 = vmatprep.subr.bf16.mxu0 0
    %74 = vmatpush1.bf16.xpose.msra.mxu0 0
    %75 = vmatprep.subr.bf16.mxu0 0
    %76 = vmatpush1.bf16.xpose.msra.mxu0 %v61
    %77 = vmatprep.subr.bf16.mxu0 0
    %78 = vmatpush1.bf16.xpose.msra.mxu0 %v58
    %79 = vmatprep.subr.bf16.mxu0 0
    %80 = vmatpush2.bf16.xpose.msra.mxu0 0
    %81 = vmatprep.subr.bf16.mxu0 0
    %82 = vmatpush2.bf16.xpose.msra.mxu0 0
    %83 = vmatprep.subr.bf16.mxu0 0
    %84 = vmatpush2.bf16.xpose.msra.mxu0 0
    %85 = vmatprep.subr.bf16.mxu0 0
    %86 = vmatpush2.bf16.xpose.msra.mxu0 0
    %87 = vmatprep.subr.bf16.mxu0 0
    %88 = vmatpush2.bf16.xpose.msra.mxu0 0
    %89 = vmatprep.subr.bf16.mxu0 0
    %90 = vmatpush2.bf16.xpose.msra.mxu0 0
    %91 = vmatprep.subr.bf16.mxu0 0
    %92 = vmatpush2.bf16.xpose.msra.mxu0 0
    %93 = vmatprep.subr.bf16.mxu0 0
    %94 = vmatpush2.bf16.xpose.msra.mxu0 0
    %95 = vmatprep.mubr.bf16.mxu0 0
    %96 = vmatmul.mubr.bf16.gmra.mxu0 %v55
    %v97 = vpop.f32.mrf.mxu0
    %v98 = vadd.f32 0.0, %v97
    %v99 = vpop.f32.mrf.mxu0
    %v100 = vpop.f32.mrf.mxu0
    %v101 = vpop.f32.mrf.mxu0
    %102 = vdwg.mxu0
    %v107 = vunpack.c.l.b16 %v27
    %v108 = vunpack.c.l.b16 %v28
    %v109 = vunpack.c.l.b16 %v29
    %v110 = vunpack.c.l.b16 %v30
    %v111 = vpack.c.b16 %v108, %v107
    %v112 = vpack.c.b16 %v110, %v109
    %v114 = vsel %vm53, %v111, 0
    %v117 = vsel %vm53, %v112, 0
    %119 = vmatprep.subr.bf16.mxu0 0
    %120 = vmatpush1.bf16.xpose.msra.mxu0 0
    %121 = vmatprep.subr.bf16.mxu0 0
    %122 = vmatpush1.bf16.xpose.msra.mxu0 0
    %123 = vmatprep.subr.bf16.mxu0 0
    %124 = vmatpush1.bf16.xpose.msra.mxu0 0
    %125 = vmatprep.subr.bf16.mxu0 0
    %126 = vmatpush1.bf16.xpose.msra.mxu0 0
    %127 = vmatprep.subr.bf16.mxu0 0
    %128 = vmatpush1.bf16.xpose.msra.mxu0 0
    %129 = vmatprep.subr.bf16.mxu0 0
    %130 = vmatpush1.bf16.xpose.msra.mxu0 0
    %131 = vmatprep.subr.bf16.mxu0 0
    %132 = vmatpush1.bf16.xpose.msra.mxu0 %v117
    %133 = vmatprep.subr.bf16.mxu0 0
    %134 = vmatpush1.bf16.xpose.msra.mxu0 %v114
    %135 = vmatprep.subr.bf16.mxu0 0
    %136 = vmatpush2.bf16.xpose.msra.mxu0 0
    %137 = vmatprep.subr.bf16.mxu0 0
    %138 = vmatpush2.bf16.xpose.msra.mxu0 0
    %139 = vmatprep.subr.bf16.mxu0 0
    %140 = vmatpush2.bf16.xpose.msra.mxu0 0
    %141 = vmatprep.subr.bf16.mxu0 0
    %142 = vmatpush2.bf16.xpose.msra.mxu0 0
    %143 = vmatprep.subr.bf16.mxu0 0
    %144 = vmatpush2.bf16.xpose.msra.mxu0 0
    %145 = vmatprep.subr.bf16.mxu0 0
    %146 = vmatpush2.bf16.xpose.msra.mxu0 0
    %147 = vmatprep.subr.bf16.mxu0 0
    %148 = vmatpush2.bf16.xpose.msra.mxu0 0
    %149 = vmatprep.subr.bf16.mxu0 0
    %150 = vmatpush2.bf16.xpose.msra.mxu0 0
    %151 = vmatprep.mubr.bf16.mxu0 0
    %152 = vmatmul.mubr.bf16.gmra.mxu0 %v55
    %v153 = vpop.f32.mrf.mxu0
    %v154 = vadd.f32 0.0, %v153
    %v155 = vpop.f32.mrf.mxu0
    %v156 = vpop.f32.mrf.mxu0
    %v157 = vpop.f32.mrf.mxu0
    %158 = vdwg.mxu0
    %v163 = vunpack.c.l.b16 %v35
    %v164 = vunpack.c.l.b16 %v36
    %v165 = vunpack.c.l.b16 %v37
    %v166 = vunpack.c.l.b16 %v38
    %v167 = vpack.c.b16 %v164, %v163
    %v168 = vpack.c.b16 %v166, %v165
    %v170 = vsel %vm53, %v167, 0
    %v173 = vsel %vm53, %v168, 0
    %175 = vmatprep.subr.bf16.mxu0 0
    %176 = vmatpush1.bf16.xpose.msra.mxu0 0
    %177 = vmatprep.subr.bf16.mxu0 0
    %178 = vmatpush1.bf16.xpose.msra.mxu0 0
    %179 = vmatprep.subr.bf16.mxu0 0
    %180 = vmatpush1.bf16.xpose.msra.mxu0 0
    %181 = vmatprep.subr.bf16.mxu0 0
    %182 = vmatpush1.bf16.xpose.msra.mxu0 0
    %183 = vmatprep.subr.bf16.mxu0 0
    %184 = vmatpush1.bf16.xpose.msra.mxu0 0
    %185 = vmatprep.subr.bf16.mxu0 0
    %186 = vmatpush1.bf16.xpose.msra.mxu0 0
    %187 = vmatprep.subr.bf16.mxu0 0
    %188 = vmatpush1.bf16.xpose.msra.mxu0 %v173
    %189 = vmatprep.subr.bf16.mxu0 0
    %190 = vmatpush1.bf16.xpose.msra.mxu0 %v170
    %191 = vmatprep.subr.bf16.mxu0 0
    %192 = vmatpush2.bf16.xpose.msra.mxu0 0
    %193 = vmatprep.subr.bf16.mxu0 0
    %194 = vmatpush2.bf16.xpose.msra.mxu0 0
    %195 = vmatprep.subr.bf16.mxu0 0
    %196 = vmatpush2.bf16.xpose.msra.mxu0 0
    %197 = vmatprep.subr.bf16.mxu0 0
    %198 = vmatpush2.bf16.xpose.msra.mxu0 0
    %199 = vmatprep.subr.bf16.mxu0 0
    %200 = vmatpush2.bf16.xpose.msra.mxu0 0
    %201 = vmatprep.subr.bf16.mxu0 0
    %202 = vmatpush2.bf16.xpose.msra.mxu0 0
    %203 = vmatprep.subr.bf16.mxu0 0
    %204 = vmatpush2.bf16.xpose.msra.mxu0 0
    %205 = vmatprep.subr.bf16.mxu0 0
    %206 = vmatpush2.bf16.xpose.msra.mxu0 0
    %207 = vmatprep.mubr.bf16.mxu0 0
    %208 = vmatmul.mubr.bf16.gmra.mxu0 %v55
    %v209 = vpop.f32.mrf.mxu0
    %v210 = vadd.f32 0.0, %v209
    %v211 = vpop.f32.mrf.mxu0
    %v212 = vpop.f32.mrf.mxu0
    %v213 = vpop.f32.mrf.mxu0
    %214 = vdwg.mxu0
    %v215 = vmul.f32 %v98, %v98
    %vm216 = vcmask 261120
    %v217 = vsel %vm216, %v215, 0.0
    %218 = vadd.xlane.f32.xlu0 %v217
    %v219 = vpop.xlane.xlu0 %218
    %v220 = vmax.f32 %v219, 1e-24
    %v221 = vrsqrt.pop %v220
    %v222 = vmul.f32 %v221, 0.17677669
    %v223 = vmul.f32 %v98, %v222
    %v224 = vmul.f32 %v154, %v154
    %v225 = vsel %vm216, %v224, 0.0
    %226 = vadd.xlane.f32.xlu0 %v225
    %v227 = vpop.xlane.xlu0 %226
    %v228 = vmax.f32 %v227, 1e-24
    %v229 = vrsqrt.pop %v228
    %v230 = vmul.f32 %v154, %v229
    %v232 = vsel %vm216, %v223, 0
    %v235 = vsel %vm216, %v230, 0
    %237 = vmatprep.subr.mxu0 0.0
    %238 = vmatpush1.xpose.msra.mxu0 0.0
    %239 = vmatprep.subr.mxu0 0.0
    %240 = vmatpush1.xpose.msra.mxu0 0.0
    %241 = vmatprep.subr.mxu0 0.0
    %242 = vmatpush1.xpose.msra.mxu0 0.0
    %243 = vmatprep.subr.mxu0 0.0
    %244 = vmatpush1.xpose.msra.mxu0 0.0
    %245 = vmatprep.subr.mxu0 0.0
    %246 = vmatpush1.xpose.msra.mxu0 0.0
    %247 = vmatprep.subr.mxu0 0.0
    %248 = vmatpush1.xpose.msra.mxu0 0.0
    %249 = vmatprep.subr.mxu0 0.0
    %250 = vmatpush1.xpose.msra.mxu0 0.0
    %251 = vmatprep.subr.mxu0 0.0
    %252 = vmatpush1.xpose.msra.mxu0 0.0
    %253 = vmatprep.subr.mxu0 0.0
    %254 = vmatpush1.xpose.msra.mxu0 0.0
    %255 = vmatprep.subr.mxu0 0.0
    %256 = vmatpush1.xpose.msra.mxu0 0.0
    %257 = vmatprep.subr.mxu0 0.0
    %258 = vmatpush1.xpose.msra.mxu0 0.0
    %259 = vmatprep.subr.mxu0 0.0
    %260 = vmatpush1.xpose.msra.mxu0 0.0
    %261 = vmatprep.subr.mxu0 0.0
    %262 = vmatpush1.xpose.msra.mxu0 0.0
    %263 = vmatprep.subr.mxu0 0.0
    %264 = vmatpush1.xpose.msra.mxu0 0.0
    %265 = vmatprep.subr.mxu0 0.0
    %266 = vmatpush1.xpose.msra.mxu0 0.0
    %267 = vmatprep.subr.mxu0 0.0
    %268 = vmatpush1.xpose.msra.mxu0 %v235
    %269 = vmatprep.subr.mxu0 0.0
    %270 = vmatpush2.xpose.msra.mxu0 0.0
    %271 = vmatprep.subr.mxu0 0.0
    %272 = vmatpush2.xpose.msra.mxu0 0.0
    %273 = vmatprep.subr.mxu0 0.0
    %274 = vmatpush2.xpose.msra.mxu0 0.0
    %275 = vmatprep.subr.mxu0 0.0
    %276 = vmatpush2.xpose.msra.mxu0 0.0
    %277 = vmatprep.subr.mxu0 0.0
    %278 = vmatpush2.xpose.msra.mxu0 0.0
    %279 = vmatprep.subr.mxu0 0.0
    %280 = vmatpush2.xpose.msra.mxu0 0.0
    %281 = vmatprep.subr.mxu0 0.0
    %282 = vmatpush2.xpose.msra.mxu0 0.0
    %283 = vmatprep.subr.mxu0 0.0
    %284 = vmatpush2.xpose.msra.mxu0 0.0
    %285 = vmatprep.subr.mxu0 0.0
    %286 = vmatpush2.xpose.msra.mxu0 0.0
    %287 = vmatprep.subr.mxu0 0.0
    %288 = vmatpush2.xpose.msra.mxu0 0.0
    %289 = vmatprep.subr.mxu0 0.0
    %290 = vmatpush2.xpose.msra.mxu0 0.0
    %291 = vmatprep.subr.mxu0 0.0
    %292 = vmatpush2.xpose.msra.mxu0 0.0
    %293 = vmatprep.subr.mxu0 0.0
    %294 = vmatpush2.xpose.msra.mxu0 0.0
    %295 = vmatprep.subr.mxu0 0.0
    %296 = vmatpush2.xpose.msra.mxu0 0.0
    %297 = vmatprep.subr.mxu0 0.0
    %298 = vmatpush2.xpose.msra.mxu0 0.0
    %299 = vmatprep.subr.mxu0 0.0
    %300 = vmatpush2.xpose.msra.mxu0 0.0
    %301 = vmatprep.mubr.f32.mxu0 0.0
    %302 = vmatmul.mubr.f32.gmra.mxu0 %v232
    %v303 = vpop.f32.mrf.mxu0
    %v304 = vadd.f32 0.0, %v303
    %v305 = vpop.f32.mrf.mxu0
    %306 = vdwg.mxu0
    %v307 = vmul.f32 %v304, 1.442695
    %v308 = vpow.pop %v307
    %vm309 = vcmask 64512
    %v310 = vsel %vm309, %v308, 0.0
    %311 = vadd.xlane.f32.xlu0 %v310
    %v312 = vpop.xlane.xlu0 %311
    %v313 = vrcp.pop %v312
    %v314 = vmul.f32 %v308, %v313
    %v315 = vpack.c.bf16 %v314, %v314
    %v316 = vpack.c.bf16 %v210, %v210
    %v318 = vsel %vm309, %v315, 0
    %vm320 = vcmask 1043456
    %v322 = vsel %vm320, %v316, 0
    %324 = vmatprep.subr.bf16.mxu0 0
    %325 = vmatpush1.bf16.msra.mxu0 0
    %326 = vmatprep.subr.bf16.mxu0 0
    %327 = vmatpush1.bf16.msra.mxu0 0
    %328 = vmatprep.subr.bf16.mxu0 0
    %329 = vmatpush1.bf16.msra.mxu0 0
    %330 = vmatprep.subr.bf16.mxu0 0
    %331 = vmatpush1.bf16.msra.mxu0 0
    %332 = vmatprep.subr.bf16.mxu0 0
    %333 = vmatpush1.bf16.msra.mxu0 0
    %334 = vmatprep.subr.bf16.mxu0 0
    %335 = vmatpush1.bf16.msra.mxu0 0
    %336 = vmatprep.subr.bf16.mxu0 0
    %337 = vmatpush1.bf16.msra.mxu0 0
    %338 = vmatprep.subr.bf16.mxu0 0
    %339 = vmatpush1.bf16.msra.mxu0 %v322
    %340 = vmatprep.subr.bf16.mxu0 0
    %341 = vmatpush2.bf16.msra.mxu0 0
    %342 = vmatprep.subr.bf16.mxu0 0
    %343 = vmatpush2.bf16.msra.mxu0 0
    %344 = vmatprep.subr.bf16.mxu0 0
    %345 = vmatpush2.bf16.msra.mxu0 0
    %346 = vmatprep.subr.bf16.mxu0 0
    %347 = vmatpush2.bf16.msra.mxu0 0
    %348 = vmatprep.subr.bf16.mxu0 0
    %349 = vmatpush2.bf16.msra.mxu0 0
    %350 = vmatprep.subr.bf16.mxu0 0
    %351 = vmatpush2.bf16.msra.mxu0 0
    %352 = vmatprep.subr.bf16.mxu0 0
    %353 = vmatpush2.bf16.msra.mxu0 0
    %354 = vmatprep.subr.bf16.mxu0 0
    %355 = vmatpush2.bf16.msra.mxu0 0
    %356 = vmatprep.mubr.bf16.mxu0 0
    %357 = vmatmul.mubr.bf16.gmra.mxu0 %v318
    %v358 = vpop.f32.mrf.mxu0
    %v359 = vadd.f32 0.0, %v358
    %v360 = vpop.f32.mrf.mxu0
    %v361 = vpop.f32.mrf.mxu0
    %v362 = vpop.f32.mrf.mxu0
    %363 = vdwg.mxu0
    %v364 = vld [vmem:[%s2] sm:$0xf]
    %v365 = vld [vmem:[%s2 + $0x4] sm:$0xf]
    %v366 = vld [vmem:[%s2 + $0x8] sm:$0xf]
    %v367 = vld [vmem:[%s2 + $0xc] sm:$0xf]
    %v368 = vld [vmem:[%s2 + $0x10] sm:$0xf]
    %v369 = vld [vmem:[%s2 + $0x14] sm:$0xf]
    %v370 = vld [vmem:[%s2 + $0x18] sm:$0xf]
    %v371 = vld [vmem:[%s2 + $0x1c] sm:$0xf]
    %v372 = vpack.c.bf16 %v359, %v359
    %v377 = vunpack.c.l.b16 %v23
    %v378 = vunpack.c.l.b16 %v24
    %v379 = vunpack.c.l.b16 %v25
    %v380 = vunpack.c.l.b16 %v26
    %v381 = vpack.c.b16 %v378, %v377
    %v382 = vpack.c.b16 %v380, %v379
    %v384 = vsel %vm53, %v381, 0
    %v387 = vsel %vm53, %v382, 0
    %389 = vmatprep.subr.bf16.mxu0 0
    %390 = vmatpush1.bf16.xpose.msra.mxu0 0
    %391 = vmatprep.subr.bf16.mxu0 0
    %392 = vmatpush1.bf16.xpose.msra.mxu0 0
    %393 = vmatprep.subr.bf16.mxu0 0
    %394 = vmatpush1.bf16.xpose.msra.mxu0 0
    %395 = vmatprep.subr.bf16.mxu0 0
    %396 = vmatpush1.bf16.xpose.msra.mxu0 0
    %397 = vmatprep.subr.bf16.mxu0 0
    %398 = vmatpush1.bf16.xpose.msra.mxu0 0
    %399 = vmatprep.subr.bf16.mxu0 0
    %400 = vmatpush1.bf16.xpose.msra.mxu0 0
    %401 = vmatprep.subr.bf16.mxu0 0
    %402 = vmatpush1.bf16.xpose.msra.mxu0 %v387
    %403 = vmatprep.subr.bf16.mxu0 0
    %404 = vmatpush1.bf16.xpose.msra.mxu0 %v384
    %405 = vmatprep.subr.bf16.mxu0 0
    %406 = vmatpush2.bf16.xpose.msra.mxu0 0
    %407 = vmatprep.subr.bf16.mxu0 0
    %408 = vmatpush2.bf16.xpose.msra.mxu0 0
    %409 = vmatprep.subr.bf16.mxu0 0
    %410 = vmatpush2.bf16.xpose.msra.mxu0 0
    %411 = vmatprep.subr.bf16.mxu0 0
    %412 = vmatpush2.bf16.xpose.msra.mxu0 0
    %413 = vmatprep.subr.bf16.mxu0 0
    %414 = vmatpush2.bf16.xpose.msra.mxu0 0
    %415 = vmatprep.subr.bf16.mxu0 0
    %416 = vmatpush2.bf16.xpose.msra.mxu0 0
    %417 = vmatprep.subr.bf16.mxu0 0
    %418 = vmatpush2.bf16.xpose.msra.mxu0 0
    %419 = vmatprep.subr.bf16.mxu0 0
    %420 = vmatpush2.bf16.xpose.msra.mxu0 0
    %421 = vmatprep.mubr.bf16.mxu0 0
    %422 = vmatmul.mubr.bf16.gmra.mxu0 %v55
    %v423 = vpop.f32.mrf.mxu0
    %v424 = vadd.f32 0.0, %v423
    %v425 = vpop.f32.mrf.mxu0
    %v426 = vpop.f32.mrf.mxu0
    %v427 = vpop.f32.mrf.mxu0
    %428 = vdwg.mxu0
    %v433 = vunpack.c.l.b16 %v31
    %v434 = vunpack.c.l.b16 %v32
    %v435 = vunpack.c.l.b16 %v33
    %v436 = vunpack.c.l.b16 %v34
    %v437 = vpack.c.b16 %v434, %v433
    %v438 = vpack.c.b16 %v436, %v435
    %v440 = vsel %vm53, %v437, 0
    %v443 = vsel %vm53, %v438, 0
    %445 = vmatprep.subr.bf16.mxu0 0
    %446 = vmatpush1.bf16.xpose.msra.mxu0 0
    %447 = vmatprep.subr.bf16.mxu0 0
    %448 = vmatpush1.bf16.xpose.msra.mxu0 0
    %449 = vmatprep.subr.bf16.mxu0 0
    %450 = vmatpush1.bf16.xpose.msra.mxu0 0
    %451 = vmatprep.subr.bf16.mxu0 0
    %452 = vmatpush1.bf16.xpose.msra.mxu0 0
    %453 = vmatprep.subr.bf16.mxu0 0
    %454 = vmatpush1.bf16.xpose.msra.mxu0 0
    %455 = vmatprep.subr.bf16.mxu0 0
    %456 = vmatpush1.bf16.xpose.msra.mxu0 0
    %457 = vmatprep.subr.bf16.mxu0 0
    %458 = vmatpush1.bf16.xpose.msra.mxu0 %v443
    %459 = vmatprep.subr.bf16.mxu0 0
    %460 = vmatpush1.bf16.xpose.msra.mxu0 %v440
    %461 = vmatprep.subr.bf16.mxu0 0
    %462 = vmatpush2.bf16.xpose.msra.mxu0 0
    %463 = vmatprep.subr.bf16.mxu0 0
    %464 = vmatpush2.bf16.xpose.msra.mxu0 0
    %465 = vmatprep.subr.bf16.mxu0 0
    %466 = vmatpush2.bf16.xpose.msra.mxu0 0
    %467 = vmatprep.subr.bf16.mxu0 0
    %468 = vmatpush2.bf16.xpose.msra.mxu0 0
    %469 = vmatprep.subr.bf16.mxu0 0
    %470 = vmatpush2.bf16.xpose.msra.mxu0 0
    %471 = vmatprep.subr.bf16.mxu0 0
    %472 = vmatpush2.bf16.xpose.msra.mxu0 0
    %473 = vmatprep.subr.bf16.mxu0 0
    %474 = vmatpush2.bf16.xpose.msra.mxu0 0
    %475 = vmatprep.subr.bf16.mxu0 0
    %476 = vmatpush2.bf16.xpose.msra.mxu0 0
    %477 = vmatprep.mubr.bf16.mxu0 0
    %478 = vmatmul.mubr.bf16.gmra.mxu0 %v55
    %v479 = vpop.f32.mrf.mxu0
    %v480 = vadd.f32 0.0, %v479
    %v481 = vpop.f32.mrf.mxu0
    %v482 = vpop.f32.mrf.mxu0
    %v483 = vpop.f32.mrf.mxu0
    %484 = vdwg.mxu0
    %v489 = vunpack.c.l.b16 %v39
    %v490 = vunpack.c.l.b16 %v40
    %v491 = vunpack.c.l.b16 %v41
    %v492 = vunpack.c.l.b16 %v42
    %v493 = vpack.c.b16 %v490, %v489
    %v494 = vpack.c.b16 %v492, %v491
    %v496 = vsel %vm53, %v493, 0
    %v499 = vsel %vm53, %v494, 0
    %501 = vmatprep.subr.bf16.mxu0 0
    %502 = vmatpush1.bf16.xpose.msra.mxu0 0
    %503 = vmatprep.subr.bf16.mxu0 0
    %504 = vmatpush1.bf16.xpose.msra.mxu0 0
    %505 = vmatprep.subr.bf16.mxu0 0
    %506 = vmatpush1.bf16.xpose.msra.mxu0 0
    %507 = vmatprep.subr.bf16.mxu0 0
    %508 = vmatpush1.bf16.xpose.msra.mxu0 0
    %509 = vmatprep.subr.bf16.mxu0 0
    %510 = vmatpush1.bf16.xpose.msra.mxu0 0
    %511 = vmatprep.subr.bf16.mxu0 0
    %512 = vmatpush1.bf16.xpose.msra.mxu0 0
    %513 = vmatprep.subr.bf16.mxu0 0
    %514 = vmatpush1.bf16.xpose.msra.mxu0 %v499
    %515 = vmatprep.subr.bf16.mxu0 0
    %516 = vmatpush1.bf16.xpose.msra.mxu0 %v496
    %517 = vmatprep.subr.bf16.mxu0 0
    %518 = vmatpush2.bf16.xpose.msra.mxu0 0
    %519 = vmatprep.subr.bf16.mxu0 0
    %520 = vmatpush2.bf16.xpose.msra.mxu0 0
    %521 = vmatprep.subr.bf16.mxu0 0
    %522 = vmatpush2.bf16.xpose.msra.mxu0 0
    %523 = vmatprep.subr.bf16.mxu0 0
    %524 = vmatpush2.bf16.xpose.msra.mxu0 0
    %525 = vmatprep.subr.bf16.mxu0 0
    %526 = vmatpush2.bf16.xpose.msra.mxu0 0
    %527 = vmatprep.subr.bf16.mxu0 0
    %528 = vmatpush2.bf16.xpose.msra.mxu0 0
    %529 = vmatprep.subr.bf16.mxu0 0
    %530 = vmatpush2.bf16.xpose.msra.mxu0 0
    %531 = vmatprep.subr.bf16.mxu0 0
    %532 = vmatpush2.bf16.xpose.msra.mxu0 0
    %533 = vmatprep.mubr.bf16.mxu0 0
    %534 = vmatmul.mubr.bf16.gmra.mxu0 %v55
    %v535 = vpop.f32.mrf.mxu0
    %v536 = vadd.f32 0.0, %v535
    %v537 = vpop.f32.mrf.mxu0
    %v538 = vpop.f32.mrf.mxu0
    %v539 = vpop.f32.mrf.mxu0
    %540 = vdwg.mxu0
    %v541 = vmul.f32 %v424, %v424
    %v542 = vsel %vm216, %v541, 0.0
    %543 = vadd.xlane.f32.xlu0 %v542
    %v544 = vpop.xlane.xlu0 %543
    %v545 = vmax.f32 %v544, 1e-24
    %v546 = vrsqrt.pop %v545
    %v547 = vmul.f32 %v546, 0.17677669
    %v548 = vmul.f32 %v424, %v547
    %v549 = vmul.f32 %v480, %v480
    %v550 = vsel %vm216, %v549, 0.0
    %551 = vadd.xlane.f32.xlu0 %v550
    %v552 = vpop.xlane.xlu0 %551
    %v553 = vmax.f32 %v552, 1e-24
    %v554 = vrsqrt.pop %v553
    %v555 = vmul.f32 %v480, %v554
    %v557 = vsel %vm216, %v548, 0
    %v560 = vsel %vm216, %v555, 0
    %562 = vmatprep.subr.mxu0 0.0
    %563 = vmatpush1.xpose.msra.mxu0 0.0
    %564 = vmatprep.subr.mxu0 0.0
    %565 = vmatpush1.xpose.msra.mxu0 0.0
    %566 = vmatprep.subr.mxu0 0.0
    %567 = vmatpush1.xpose.msra.mxu0 0.0
    %568 = vmatprep.subr.mxu0 0.0
    %569 = vmatpush1.xpose.msra.mxu0 0.0
    %570 = vmatprep.subr.mxu0 0.0
    %571 = vmatpush1.xpose.msra.mxu0 0.0
    %572 = vmatprep.subr.mxu0 0.0
    %573 = vmatpush1.xpose.msra.mxu0 0.0
    %574 = vmatprep.subr.mxu0 0.0
    %575 = vmatpush1.xpose.msra.mxu0 0.0
    %576 = vmatprep.subr.mxu0 0.0
    %577 = vmatpush1.xpose.msra.mxu0 0.0
    %578 = vmatprep.subr.mxu0 0.0
    %579 = vmatpush1.xpose.msra.mxu0 0.0
    %580 = vmatprep.subr.mxu0 0.0
    %581 = vmatpush1.xpose.msra.mxu0 0.0
    %582 = vmatprep.subr.mxu0 0.0
    %583 = vmatpush1.xpose.msra.mxu0 0.0
    %584 = vmatprep.subr.mxu0 0.0
    %585 = vmatpush1.xpose.msra.mxu0 0.0
    %586 = vmatprep.subr.mxu0 0.0
    %587 = vmatpush1.xpose.msra.mxu0 0.0
    %588 = vmatprep.subr.mxu0 0.0
    %589 = vmatpush1.xpose.msra.mxu0 0.0
    %590 = vmatprep.subr.mxu0 0.0
    %591 = vmatpush1.xpose.msra.mxu0 0.0
    %592 = vmatprep.subr.mxu0 0.0
    %593 = vmatpush1.xpose.msra.mxu0 %v560
    %594 = vmatprep.subr.mxu0 0.0
    %595 = vmatpush2.xpose.msra.mxu0 0.0
    %596 = vmatprep.subr.mxu0 0.0
    %597 = vmatpush2.xpose.msra.mxu0 0.0
    %598 = vmatprep.subr.mxu0 0.0
    %599 = vmatpush2.xpose.msra.mxu0 0.0
    %600 = vmatprep.subr.mxu0 0.0
    %601 = vmatpush2.xpose.msra.mxu0 0.0
    %602 = vmatprep.subr.mxu0 0.0
    %603 = vmatpush2.xpose.msra.mxu0 0.0
    %604 = vmatprep.subr.mxu0 0.0
    %605 = vmatpush2.xpose.msra.mxu0 0.0
    %606 = vmatprep.subr.mxu0 0.0
    %607 = vmatpush2.xpose.msra.mxu0 0.0
    %608 = vmatprep.subr.mxu0 0.0
    %609 = vmatpush2.xpose.msra.mxu0 0.0
    %610 = vmatprep.subr.mxu0 0.0
    %611 = vmatpush2.xpose.msra.mxu0 0.0
    %612 = vmatprep.subr.mxu0 0.0
    %613 = vmatpush2.xpose.msra.mxu0 0.0
    %614 = vmatprep.subr.mxu0 0.0
    %615 = vmatpush2.xpose.msra.mxu0 0.0
    %616 = vmatprep.subr.mxu0 0.0
    %617 = vmatpush2.xpose.msra.mxu0 0.0
    %618 = vmatprep.subr.mxu0 0.0
    %619 = vmatpush2.xpose.msra.mxu0 0.0
    %620 = vmatprep.subr.mxu0 0.0
    %621 = vmatpush2.xpose.msra.mxu0 0.0
    %622 = vmatprep.subr.mxu0 0.0
    %623 = vmatpush2.xpose.msra.mxu0 0.0
    %624 = vmatprep.subr.mxu0 0.0
    %625 = vmatpush2.xpose.msra.mxu0 0.0
    %626 = vmatprep.mubr.f32.mxu0 0.0
    %627 = vmatmul.mubr.f32.gmra.mxu0 %v557
    %v628 = vpop.f32.mrf.mxu0
    %v629 = vadd.f32 0.0, %v628
    %v630 = vpop.f32.mrf.mxu0
    %631 = vdwg.mxu0
    %v632 = vmul.f32 %v629, 1.442695
    %v633 = vpow.pop %v632
    %v634 = vsel %vm309, %v633, 0.0
    %635 = vadd.xlane.f32.xlu0 %v634
    %v636 = vpop.xlane.xlu0 %635
    %v637 = vrcp.pop %v636
    %v638 = vmul.f32 %v633, %v637
    %v639 = vpack.c.bf16 %v638, %v638
    %v640 = vpack.c.bf16 %v536, %v536
    %v642 = vsel %vm309, %v639, 0
    %v645 = vsel %vm320, %v640, 0
    %647 = vmatprep.subr.bf16.mxu0 0
    %648 = vmatpush1.bf16.msra.mxu0 0
    %649 = vmatprep.subr.bf16.mxu0 0
    %650 = vmatpush1.bf16.msra.mxu0 0
    %651 = vmatprep.subr.bf16.mxu0 0
    %652 = vmatpush1.bf16.msra.mxu0 0
    %653 = vmatprep.subr.bf16.mxu0 0
    %654 = vmatpush1.bf16.msra.mxu0 0
    %655 = vmatprep.subr.bf16.mxu0 0
    %656 = vmatpush1.bf16.msra.mxu0 0
    %657 = vmatprep.subr.bf16.mxu0 0
    %658 = vmatpush1.bf16.msra.mxu0 0
    %659 = vmatprep.subr.bf16.mxu0 0
    %660 = vmatpush1.bf16.msra.mxu0 0
    %661 = vmatprep.subr.bf16.mxu0 0
    %662 = vmatpush1.bf16.msra.mxu0 %v645
    %663 = vmatprep.subr.bf16.mxu0 0
    %664 = vmatpush2.bf16.msra.mxu0 0
    %665 = vmatprep.subr.bf16.mxu0 0
    %666 = vmatpush2.bf16.msra.mxu0 0
    %667 = vmatprep.subr.bf16.mxu0 0
    %668 = vmatpush2.bf16.msra.mxu0 0
    %669 = vmatprep.subr.bf16.mxu0 0
    %670 = vmatpush2.bf16.msra.mxu0 0
    %671 = vmatprep.subr.bf16.mxu0 0
    %672 = vmatpush2.bf16.msra.mxu0 0
    %673 = vmatprep.subr.bf16.mxu0 0
    %674 = vmatpush2.bf16.msra.mxu0 0
    %675 = vmatprep.subr.bf16.mxu0 0
    %676 = vmatpush2.bf16.msra.mxu0 0
    %677 = vmatprep.subr.bf16.mxu0 0
    %678 = vmatpush2.bf16.msra.mxu0 0
    %679 = vmatprep.mubr.bf16.mxu0 0
    %680 = vmatmul.mubr.bf16.gmra.mxu0 %v642
    %v681 = vpop.f32.mrf.mxu0
    %v682 = vadd.f32 0.0, %v681
    %v683 = vpop.f32.mrf.mxu0
    %v684 = vpop.f32.mrf.mxu0
    %v685 = vpop.f32.mrf.mxu0
    %686 = vdwg.mxu0
    %s687 = scalar_lea.vmem %s2, 32
    %v688 = vld [vmem:[%s687] sm:$0xf]
    %v689 = vld [vmem:[%s687 + $0x4] sm:$0xf]
    %v690 = vld [vmem:[%s687 + $0x8] sm:$0xf]
    %v691 = vld [vmem:[%s687 + $0xc] sm:$0xf]
    %v692 = vld [vmem:[%s687 + $0x10] sm:$0xf]
    %v693 = vld [vmem:[%s687 + $0x14] sm:$0xf]
    %v694 = vld [vmem:[%s687 + $0x18] sm:$0xf]
    %v695 = vld [vmem:[%s687 + $0x1c] sm:$0xf]
    %v696 = vpack.c.bf16 %v682, %v682
    %v705 = vunpack.c.l.b16 %v688
    %v706 = vunpack.c.l.b16 %v689
    %v707 = vunpack.c.l.b16 %v690
    %v708 = vunpack.c.l.b16 %v691
    %v709 = vunpack.c.l.b16 %v692
    %v710 = vunpack.c.l.b16 %v693
    %v711 = vunpack.c.l.b16 %v694
    %v712 = vunpack.c.l.b16 %v695
    %v713 = vpack.c.b16 %v706, %v705
    %v714 = vpack.c.b16 %v708, %v707
    %v715 = vpack.c.b16 %v710, %v709
    %v716 = vpack.c.b16 %v712, %v711
    %v718 = vsel %vm216, %v696, 0
    %v721 = vsel %vm216, %v713, 0
    %v724 = vsel %vm216, %v714, 0
    %v727 = vsel %vm216, %v715, 0
    %v730 = vsel %vm216, %v716, 0
    %732 = vmatprep.subr.bf16.mxu0 0
    %733 = vmatpush1.bf16.xpose.msra.mxu0 0
    %734 = vmatprep.subr.bf16.mxu0 0
    %735 = vmatpush1.bf16.xpose.msra.mxu0 0
    %736 = vmatprep.subr.bf16.mxu0 0
    %737 = vmatpush1.bf16.xpose.msra.mxu0 0
    %738 = vmatprep.subr.bf16.mxu0 0
    %739 = vmatpush1.bf16.xpose.msra.mxu0 0
    %740 = vmatprep.subr.bf16.mxu0 0
    %741 = vmatpush1.bf16.xpose.msra.mxu0 %v730
    %742 = vmatprep.subr.bf16.mxu0 0
    %743 = vmatpush1.bf16.xpose.msra.mxu0 %v727
    %744 = vmatprep.subr.bf16.mxu0 0
    %745 = vmatpush1.bf16.xpose.msra.mxu0 %v724
    %746 = vmatprep.subr.bf16.mxu0 0
    %747 = vmatpush1.bf16.xpose.msra.mxu0 %v721
    %748 = vmatprep.subr.bf16.mxu0 0
    %749 = vmatpush2.bf16.xpose.msra.mxu0 0
    %750 = vmatprep.subr.bf16.mxu0 0
    %751 = vmatpush2.bf16.xpose.msra.mxu0 0
    %752 = vmatprep.subr.bf16.mxu0 0
    %753 = vmatpush2.bf16.xpose.msra.mxu0 0
    %754 = vmatprep.subr.bf16.mxu0 0
    %755 = vmatpush2.bf16.xpose.msra.mxu0 0
    %756 = vmatprep.subr.bf16.mxu0 0
    %757 = vmatpush2.bf16.xpose.msra.mxu0 0
    %758 = vmatprep.subr.bf16.mxu0 0
    %759 = vmatpush2.bf16.xpose.msra.mxu0 0
    %760 = vmatprep.subr.bf16.mxu0 0
    %761 = vmatpush2.bf16.xpose.msra.mxu0 0
    %762 = vmatprep.subr.bf16.mxu0 0
    %763 = vmatpush2.bf16.xpose.msra.mxu0 0
    %764 = vmatprep.mubr.bf16.mxu0 0
    %765 = vmatmul.mubr.bf16.gmra.mxu0 %v718
    %v766 = vpop.f32.mrf.mxu0
    %v767 = vadd.f32 0.0, %v766
    %v768 = vpop.f32.mrf.mxu0
    %v769 = vpop.f32.mrf.mxu0
    %v770 = vpop.f32.mrf.mxu0
    %771 = vdwg.mxu0
    %v780 = vunpack.c.l.b16 %v364
    %v781 = vunpack.c.l.b16 %v365
    %v782 = vunpack.c.l.b16 %v366
    %v783 = vunpack.c.l.b16 %v367
    %v784 = vunpack.c.l.b16 %v368
    %v785 = vunpack.c.l.b16 %v369
    %v786 = vunpack.c.l.b16 %v370
    %v787 = vunpack.c.l.b16 %v371
    %v788 = vpack.c.b16 %v781, %v780
    %v789 = vpack.c.b16 %v783, %v782
    %v790 = vpack.c.b16 %v785, %v784
    %v791 = vpack.c.b16 %v787, %v786
    %v793 = vsel %vm216, %v372, 0
    %v796 = vsel %vm216, %v788, 0
    %v799 = vsel %vm216, %v789, 0
    %v802 = vsel %vm216, %v790, 0
    %v805 = vsel %vm216, %v791, 0
    %807 = vmatprep.subr.bf16.mxu0 0
    %808 = vmatpush1.bf16.xpose.msra.mxu0 0
    %809 = vmatprep.subr.bf16.mxu0 0
    %810 = vmatpush1.bf16.xpose.msra.mxu0 0
    %811 = vmatprep.subr.bf16.mxu0 0
    %812 = vmatpush1.bf16.xpose.msra.mxu0 0
    %813 = vmatprep.subr.bf16.mxu0 0
    %814 = vmatpush1.bf16.xpose.msra.mxu0 0
    %815 = vmatprep.subr.bf16.mxu0 0
    %816 = vmatpush1.bf16.xpose.msra.mxu0 %v805
    %817 = vmatprep.subr.bf16.mxu0 0
    %818 = vmatpush1.bf16.xpose.msra.mxu0 %v802
    %819 = vmatprep.subr.bf16.mxu0 0
    %820 = vmatpush1.bf16.xpose.msra.mxu0 %v799
    %821 = vmatprep.subr.bf16.mxu0 0
    %822 = vmatpush1.bf16.xpose.msra.mxu0 %v796
    %823 = vmatprep.subr.bf16.mxu0 0
    %824 = vmatpush2.bf16.xpose.msra.mxu0 0
    %825 = vmatprep.subr.bf16.mxu0 0
    %826 = vmatpush2.bf16.xpose.msra.mxu0 0
    %827 = vmatprep.subr.bf16.mxu0 0
    %828 = vmatpush2.bf16.xpose.msra.mxu0 0
    %829 = vmatprep.subr.bf16.mxu0 0
    %830 = vmatpush2.bf16.xpose.msra.mxu0 0
    %831 = vmatprep.subr.bf16.mxu0 0
    %832 = vmatpush2.bf16.xpose.msra.mxu0 0
    %833 = vmatprep.subr.bf16.mxu0 0
    %834 = vmatpush2.bf16.xpose.msra.mxu0 0
    %835 = vmatprep.subr.bf16.mxu0 0
    %836 = vmatpush2.bf16.xpose.msra.mxu0 0
    %837 = vmatprep.subr.bf16.mxu0 0
    %838 = vmatpush2.bf16.xpose.msra.mxu0 0
    %839 = vmatprep.mubr.bf16.mxu0 0
    %840 = vmatmul.mubr.bf16.gmra.mxu0 %v793
    %v841 = vpop.f32.mrf.mxu0
    %v842 = vadd.f32 %v767, %v841
    %v843 = vpop.f32.mrf.mxu0
    %v844 = vpop.f32.mrf.mxu0
    %v845 = vpop.f32.mrf.mxu0
    %846 = vdwg.mxu0
    %847 = vst.msk [vmem:[#allocation2] sm:$0xff] %vm53, %v842
    %v849 = vrot.slane %v18, 4
    %v851 = vsel %vm53, %v849, 0
    %853 = vmatprep.subr.bf16.mxu0 0
    %854 = vmatpush1.bf16.xpose.msra.mxu0 0
    %855 = vmatprep.subr.bf16.mxu0 0
    %856 = vmatpush1.bf16.xpose.msra.mxu0 0
    %857 = vmatprep.subr.bf16.mxu0 0
    %858 = vmatpush1.bf16.xpose.msra.mxu0 0
    %859 = vmatprep.subr.bf16.mxu0 0
    %860 = vmatpush1.bf16.xpose.msra.mxu0 0
    %861 = vmatprep.subr.bf16.mxu0 0
    %862 = vmatpush1.bf16.xpose.msra.mxu0 0
    %863 = vmatprep.subr.bf16.mxu0 0
    %864 = vmatpush1.bf16.xpose.msra.mxu0 0
    %865 = vmatprep.subr.bf16.mxu0 0
    %866 = vmatpush1.bf16.xpose.msra.mxu0 %v61
    %867 = vmatprep.subr.bf16.mxu0 0
    %868 = vmatpush1.bf16.xpose.msra.mxu0 %v58
    %869 = vmatprep.subr.bf16.mxu0 0
    %870 = vmatpush2.bf16.xpose.msra.mxu0 0
    %871 = vmatprep.subr.bf16.mxu0 0
    %872 = vmatpush2.bf16.xpose.msra.mxu0 0
    %873 = vmatprep.subr.bf16.mxu0 0
    %874 = vmatpush2.bf16.xpose.msra.mxu0 0
    %875 = vmatprep.subr.bf16.mxu0 0
    %876 = vmatpush2.bf16.xpose.msra.mxu0 0
    %877 = vmatprep.subr.bf16.mxu0 0
    %878 = vmatpush2.bf16.xpose.msra.mxu0 0
    %879 = vmatprep.subr.bf16.mxu0 0
    %880 = vmatpush2.bf16.xpose.msra.mxu0 0
    %881 = vmatprep.subr.bf16.mxu0 0
    %882 = vmatpush2.bf16.xpose.msra.mxu0 0
    %883 = vmatprep.subr.bf16.mxu0 0
    %884 = vmatpush2.bf16.xpose.msra.mxu0 0
    %885 = vmatprep.mubr.bf16.mxu0 0
    %886 = vmatmul.mubr.bf16.gmra.mxu0 %v851
    %v887 = vpop.f32.mrf.mxu0
    %v888 = vadd.f32 0.0, %v887
    %v889 = vpop.f32.mrf.mxu0
    %v890 = vpop.f32.mrf.mxu0
    %v891 = vpop.f32.mrf.mxu0
    %892 = vdwg.mxu0
    %893 = vmatprep.subr.bf16.mxu0 0
    %894 = vmatpush1.bf16.xpose.msra.mxu0 0
    %895 = vmatprep.subr.bf16.mxu0 0
    %896 = vmatpush1.bf16.xpose.msra.mxu0 0
    %897 = vmatprep.subr.bf16.mxu0 0
    %898 = vmatpush1.bf16.xpose.msra.mxu0 0
    %899 = vmatprep.subr.bf16.mxu0 0
    %900 = vmatpush1.bf16.xpose.msra.mxu0 0
    %901 = vmatprep.subr.bf16.mxu0 0
    %902 = vmatpush1.bf16.xpose.msra.mxu0 0
    %903 = vmatprep.subr.bf16.mxu0 0
    %904 = vmatpush1.bf16.xpose.msra.mxu0 0
    %905 = vmatprep.subr.bf16.mxu0 0
    %906 = vmatpush1.bf16.xpose.msra.mxu0 %v117
    %907 = vmatprep.subr.bf16.mxu0 0
    %908 = vmatpush1.bf16.xpose.msra.mxu0 %v114
    %909 = vmatprep.subr.bf16.mxu0 0
    %910 = vmatpush2.bf16.xpose.msra.mxu0 0
    %911 = vmatprep.subr.bf16.mxu0 0
    %912 = vmatpush2.bf16.xpose.msra.mxu0 0
    %913 = vmatprep.subr.bf16.mxu0 0
    %914 = vmatpush2.bf16.xpose.msra.mxu0 0
    %915 = vmatprep.subr.bf16.mxu0 0
    %916 = vmatpush2.bf16.xpose.msra.mxu0 0
    %917 = vmatprep.subr.bf16.mxu0 0
    %918 = vmatpush2.bf16.xpose.msra.mxu0 0
    %919 = vmatprep.subr.bf16.mxu0 0
    %920 = vmatpush2.bf16.xpose.msra.mxu0 0
    %921 = vmatprep.subr.bf16.mxu0 0
    %922 = vmatpush2.bf16.xpose.msra.mxu0 0
    %923 = vmatprep.subr.bf16.mxu0 0
    %924 = vmatpush2.bf16.xpose.msra.mxu0 0
    %925 = vmatprep.mubr.bf16.mxu0 0
    %926 = vmatmul.mubr.bf16.gmra.mxu0 %v851
    %v927 = vpop.f32.mrf.mxu0
    %v928 = vadd.f32 0.0, %v927
    %v929 = vpop.f32.mrf.mxu0
    %v930 = vpop.f32.mrf.mxu0
    %v931 = vpop.f32.mrf.mxu0
    %932 = vdwg.mxu0
    %933 = vmatprep.subr.bf16.mxu0 0
    %934 = vmatpush1.bf16.xpose.msra.mxu0 0
    %935 = vmatprep.subr.bf16.mxu0 0
    %936 = vmatpush1.bf16.xpose.msra.mxu0 0
    %937 = vmatprep.subr.bf16.mxu0 0
    %938 = vmatpush1.bf16.xpose.msra.mxu0 0
    %939 = vmatprep.subr.bf16.mxu0 0
    %940 = vmatpush1.bf16.xpose.msra.mxu0 0
    %941 = vmatprep.subr.bf16.mxu0 0
    %942 = vmatpush1.bf16.xpose.msra.mxu0 0
    %943 = vmatprep.subr.bf16.mxu0 0
    %944 = vmatpush1.bf16.xpose.msra.mxu0 0
    %945 = vmatprep.subr.bf16.mxu0 0
    %946 = vmatpush1.bf16.xpose.msra.mxu0 %v173
    %947 = vmatprep.subr.bf16.mxu0 0
    %948 = vmatpush1.bf16.xpose.msra.mxu0 %v170
    %949 = vmatprep.subr.bf16.mxu0 0
    %950 = vmatpush2.bf16.xpose.msra.mxu0 0
    %951 = vmatprep.subr.bf16.mxu0 0
    %952 = vmatpush2.bf16.xpose.msra.mxu0 0
    %953 = vmatprep.subr.bf16.mxu0 0
    %954 = vmatpush2.bf16.xpose.msra.mxu0 0
    %955 = vmatprep.subr.bf16.mxu0 0
    %956 = vmatpush2.bf16.xpose.msra.mxu0 0
    %957 = vmatprep.subr.bf16.mxu0 0
    %958 = vmatpush2.bf16.xpose.msra.mxu0 0
    %959 = vmatprep.subr.bf16.mxu0 0
    %960 = vmatpush2.bf16.xpose.msra.mxu0 0
    %961 = vmatprep.subr.bf16.mxu0 0
    %962 = vmatpush2.bf16.xpose.msra.mxu0 0
    %963 = vmatprep.subr.bf16.mxu0 0
    %964 = vmatpush2.bf16.xpose.msra.mxu0 0
    %965 = vmatprep.mubr.bf16.mxu0 0
    %966 = vmatmul.mubr.bf16.gmra.mxu0 %v851
    %v967 = vpop.f32.mrf.mxu0
    %v968 = vadd.f32 0.0, %v967
    %v969 = vpop.f32.mrf.mxu0
    %v970 = vpop.f32.mrf.mxu0
    %v971 = vpop.f32.mrf.mxu0
    %972 = vdwg.mxu0
    %v973 = vmul.f32 %v888, %v888
    %v974 = vsel %vm216, %v973, 0.0
    %975 = vadd.xlane.f32.xlu0 %v974
    %v976 = vpop.xlane.xlu0 %975
    %v977 = vmax.f32 %v976, 1e-24
    %v978 = vrsqrt.pop %v977
    %v979 = vmul.f32 %v978, 0.17677669
    %v980 = vmul.f32 %v888, %v979
    %v981 = vmul.f32 %v928, %v928
    %v982 = vsel %vm216, %v981, 0.0
    %983 = vadd.xlane.f32.xlu0 %v982
    %v984 = vpop.xlane.xlu0 %983
    %v985 = vmax.f32 %v984, 1e-24
    %v986 = vrsqrt.pop %v985
    %v987 = vmul.f32 %v928, %v986
    %v989 = vsel %vm216, %v980, 0
    %v992 = vsel %vm216, %v987, 0
    %994 = vmatprep.subr.mxu0 0.0
    %995 = vmatpush1.xpose.msra.mxu0 0.0
    %996 = vmatprep.subr.mxu0 0.0
    %997 = vmatpush1.xpose.msra.mxu0 0.0
    %998 = vmatprep.subr.mxu0 0.0
    %999 = vmatpush1.xpose.msra.mxu0 0.0
    %1000 = vmatprep.subr.mxu0 0.0
    %1001 = vmatpush1.xpose.msra.mxu0 0.0
    %1002 = vmatprep.subr.mxu0 0.0
    %1003 = vmatpush1.xpose.msra.mxu0 0.0
    %1004 = vmatprep.subr.mxu0 0.0
    %1005 = vmatpush1.xpose.msra.mxu0 0.0
    %1006 = vmatprep.subr.mxu0 0.0
    %1007 = vmatpush1.xpose.msra.mxu0 0.0
    %1008 = vmatprep.subr.mxu0 0.0
    %1009 = vmatpush1.xpose.msra.mxu0 0.0
    %1010 = vmatprep.subr.mxu0 0.0
    %1011 = vmatpush1.xpose.msra.mxu0 0.0
    %1012 = vmatprep.subr.mxu0 0.0
    %1013 = vmatpush1.xpose.msra.mxu0 0.0
    %1014 = vmatprep.subr.mxu0 0.0
    %1015 = vmatpush1.xpose.msra.mxu0 0.0
    %1016 = vmatprep.subr.mxu0 0.0
    %1017 = vmatpush1.xpose.msra.mxu0 0.0
    %1018 = vmatprep.subr.mxu0 0.0
    %1019 = vmatpush1.xpose.msra.mxu0 0.0
    %1020 = vmatprep.subr.mxu0 0.0
    %1021 = vmatpush1.xpose.msra.mxu0 0.0
    %1022 = vmatprep.subr.mxu0 0.0
    %1023 = vmatpush1.xpose.msra.mxu0 0.0
    %1024 = vmatprep.subr.mxu0 0.0
    %1025 = vmatpush1.xpose.msra.mxu0 %v992
    %1026 = vmatprep.subr.mxu0 0.0
    %1027 = vmatpush2.xpose.msra.mxu0 0.0
    %1028 = vmatprep.subr.mxu0 0.0
    %1029 = vmatpush2.xpose.msra.mxu0 0.0
    %1030 = vmatprep.subr.mxu0 0.0
    %1031 = vmatpush2.xpose.msra.mxu0 0.0
    %1032 = vmatprep.subr.mxu0 0.0
    %1033 = vmatpush2.xpose.msra.mxu0 0.0
    %1034 = vmatprep.subr.mxu0 0.0
    %1035 = vmatpush2.xpose.msra.mxu0 0.0
    %1036 = vmatprep.subr.mxu0 0.0
    %1037 = vmatpush2.xpose.msra.mxu0 0.0
    %1038 = vmatprep.subr.mxu0 0.0
    %1039 = vmatpush2.xpose.msra.mxu0 0.0
    %1040 = vmatprep.subr.mxu0 0.0
    %1041 = vmatpush2.xpose.msra.mxu0 0.0
    %1042 = vmatprep.subr.mxu0 0.0
    %1043 = vmatpush2.xpose.msra.mxu0 0.0
    %1044 = vmatprep.subr.mxu0 0.0
    %1045 = vmatpush2.xpose.msra.mxu0 0.0
    %1046 = vmatprep.subr.mxu0 0.0
    %1047 = vmatpush2.xpose.msra.mxu0 0.0
    %1048 = vmatprep.subr.mxu0 0.0
    %1049 = vmatpush2.xpose.msra.mxu0 0.0
    %1050 = vmatprep.subr.mxu0 0.0
    %1051 = vmatpush2.xpose.msra.mxu0 0.0
    %1052 = vmatprep.subr.mxu0 0.0
    %1053 = vmatpush2.xpose.msra.mxu0 0.0
    %1054 = vmatprep.subr.mxu0 0.0
    %1055 = vmatpush2.xpose.msra.mxu0 0.0
    %1056 = vmatprep.subr.mxu0 0.0
    %1057 = vmatpush2.xpose.msra.mxu0 0.0
    %1058 = vmatprep.mubr.f32.mxu0 0.0
    %1059 = vmatmul.mubr.f32.gmra.mxu0 %v989
    %v1060 = vpop.f32.mrf.mxu0
    %v1061 = vadd.f32 0.0, %v1060
    %v1062 = vpop.f32.mrf.mxu0
    %1063 = vdwg.mxu0
    %v1064 = vmul.f32 %v1061, 1.442695
    %v1065 = vpow.pop %v1064
    %v1066 = vsel %vm309, %v1065, 0.0
    %1067 = vadd.xlane.f32.xlu0 %v1066
    %v1068 = vpop.xlane.xlu0 %1067
    %v1069 = vrcp.pop %v1068
    %v1070 = vmul.f32 %v1065, %v1069
    %v1071 = vpack.c.bf16 %v1070, %v1070
    %v1072 = vpack.c.bf16 %v968, %v968
    %v1074 = vsel %vm309, %v1071, 0
    %v1077 = vsel %vm320, %v1072, 0
    %1079 = vmatprep.subr.bf16.mxu0 0
    %1080 = vmatpush1.bf16.msra.mxu0 0
    %1081 = vmatprep.subr.bf16.mxu0 0
    %1082 = vmatpush1.bf16.msra.mxu0 0
    %1083 = vmatprep.subr.bf16.mxu0 0
    %1084 = vmatpush1.bf16.msra.mxu0 0
    %1085 = vmatprep.subr.bf16.mxu0 0
    %1086 = vmatpush1.bf16.msra.mxu0 0
    %1087 = vmatprep.subr.bf16.mxu0 0
    %1088 = vmatpush1.bf16.msra.mxu0 0
    %1089 = vmatprep.subr.bf16.mxu0 0
    %1090 = vmatpush1.bf16.msra.mxu0 0
    %1091 = vmatprep.subr.bf16.mxu0 0
    %1092 = vmatpush1.bf16.msra.mxu0 0
    %1093 = vmatprep.subr.bf16.mxu0 0
    %1094 = vmatpush1.bf16.msra.mxu0 %v1077
    %1095 = vmatprep.subr.bf16.mxu0 0
    %1096 = vmatpush2.bf16.msra.mxu0 0
    %1097 = vmatprep.subr.bf16.mxu0 0
    %1098 = vmatpush2.bf16.msra.mxu0 0
    %1099 = vmatprep.subr.bf16.mxu0 0
    %1100 = vmatpush2.bf16.msra.mxu0 0
    %1101 = vmatprep.subr.bf16.mxu0 0
    %1102 = vmatpush2.bf16.msra.mxu0 0
    %1103 = vmatprep.subr.bf16.mxu0 0
    %1104 = vmatpush2.bf16.msra.mxu0 0
    %1105 = vmatprep.subr.bf16.mxu0 0
    %1106 = vmatpush2.bf16.msra.mxu0 0
    %1107 = vmatprep.subr.bf16.mxu0 0
    %1108 = vmatpush2.bf16.msra.mxu0 0
    %1109 = vmatprep.subr.bf16.mxu0 0
    %1110 = vmatpush2.bf16.msra.mxu0 0
    %1111 = vmatprep.mubr.bf16.mxu0 0
    %1112 = vmatmul.mubr.bf16.gmra.mxu0 %v1074
    %v1113 = vpop.f32.mrf.mxu0
    %v1114 = vadd.f32 0.0, %v1113
    %v1115 = vpop.f32.mrf.mxu0
    %v1116 = vpop.f32.mrf.mxu0
    %v1117 = vpop.f32.mrf.mxu0
    %1118 = vdwg.mxu0
    %v1119 = vld [vmem:[%s2] sm:$0xf]
    %v1120 = vld [vmem:[%s2 + $0x4] sm:$0xf]
    %v1121 = vld [vmem:[%s2 + $0x8] sm:$0xf]
    %v1122 = vld [vmem:[%s2 + $0xc] sm:$0xf]
    %v1123 = vld [vmem:[%s2 + $0x10] sm:$0xf]
    %v1124 = vld [vmem:[%s2 + $0x14] sm:$0xf]
    %v1125 = vld [vmem:[%s2 + $0x18] sm:$0xf]
    %v1126 = vld [vmem:[%s2 + $0x1c] sm:$0xf]
    %v1127 = vpack.c.bf16 %v1114, %v1114
    %1128 = vmatprep.subr.bf16.mxu0 0
    %1129 = vmatpush1.bf16.xpose.msra.mxu0 0
    %1130 = vmatprep.subr.bf16.mxu0 0
    %1131 = vmatpush1.bf16.xpose.msra.mxu0 0
    %1132 = vmatprep.subr.bf16.mxu0 0
    %1133 = vmatpush1.bf16.xpose.msra.mxu0 0
    %1134 = vmatprep.subr.bf16.mxu0 0
    %1135 = vmatpush1.bf16.xpose.msra.mxu0 0
    %1136 = vmatprep.subr.bf16.mxu0 0
    %1137 = vmatpush1.bf16.xpose.msra.mxu0 0
    %1138 = vmatprep.subr.bf16.mxu0 0
    %1139 = vmatpush1.bf16.xpose.msra.mxu0 0
    %1140 = vmatprep.subr.bf16.mxu0 0
    %1141 = vmatpush1.bf16.xpose.msra.mxu0 %v387
    %1142 = vmatprep.subr.bf16.mxu0 0
    %1143 = vmatpush1.bf16.xpose.msra.mxu0 %v384
    %1144 = vmatprep.subr.bf16.mxu0 0
    %1145 = vmatpush2.bf16.xpose.msra.mxu0 0
    %1146 = vmatprep.subr.bf16.mxu0 0
    %1147 = vmatpush2.bf16.xpose.msra.mxu0 0
    %1148 = vmatprep.subr.bf16.mxu0 0
    %1149 = vmatpush2.bf16.xpose.msra.mxu0 0
    %1150 = vmatprep.subr.bf16.mxu0 0
    %1151 = vmatpush2.bf16.xpose.msra.mxu0 0
    %1152 = vmatprep.subr.bf16.mxu0 0
    %1153 = vmatpush2.bf16.xpose.msra.mxu0 0
    %1154 = vmatprep.subr.bf16.mxu0 0
    %1155 = vmatpush2.bf16.xpose.msra.mxu0 0
    %1156 = vmatprep.subr.bf16.mxu0 0
    %1157 = vmatpush2.bf16.xpose.msra.mxu0 0
    %1158 = vmatprep.subr.bf16.mxu0 0
    %1159 = vmatpush2.bf16.xpose.msra.mxu0 0
    %1160 = vmatprep.mubr.bf16.mxu0 0
    %1161 = vmatmul.mubr.bf16.gmra.mxu0 %v851
    %v1162 = vpop.f32.mrf.mxu0
    %v1163 = vadd.f32 0.0, %v1162
    %v1164 = vpop.f32.mrf.mxu0
    %v1165 = vpop.f32.mrf.mxu0
    %v1166 = vpop.f32.mrf.mxu0
    %1167 = vdwg.mxu0
    %1168 = vmatprep.subr.bf16.mxu0 0
    %1169 = vmatpush1.bf16.xpose.msra.mxu0 0
    %1170 = vmatprep.subr.bf16.mxu0 0
    %1171 = vmatpush1.bf16.xpose.msra.mxu0 0
    %1172 = vmatprep.subr.bf16.mxu0 0
    %1173 = vmatpush1.bf16.xpose.msra.mxu0 0
    %1174 = vmatprep.subr.bf16.mxu0 0
    %1175 = vmatpush1.bf16.xpose.msra.mxu0 0
    %1176 = vmatprep.subr.bf16.mxu0 0
    %1177 = vmatpush1.bf16.xpose.msra.mxu0 0
    %1178 = vmatprep.subr.bf16.mxu0 0
    %1179 = vmatpush1.bf16.xpose.msra.mxu0 0
    %1180 = vmatprep.subr.bf16.mxu0 0
    %1181 = vmatpush1.bf16.xpose.msra.mxu0 %v443
    %1182 = vmatprep.subr.bf16.mxu0 0
    %1183 = vmatpush1.bf16.xpose.msra.mxu0 %v440
    %1184 = vmatprep.subr.bf16.mxu0 0
    %1185 = vmatpush2.bf16.xpose.msra.mxu0 0
    %1186 = vmatprep.subr.bf16.mxu0 0
    %1187 = vmatpush2.bf16.xpose.msra.mxu0 0
    %1188 = vmatprep.subr.bf16.mxu0 0
    %1189 = vmatpush2.bf16.xpose.msra.mxu0 0
    %1190 = vmatprep.subr.bf16.mxu0 0
    %1191 = vmatpush2.bf16.xpose.msra.mxu0 0
    %1192 = vmatprep.subr.bf16.mxu0 0
    %1193 = vmatpush2.bf16.xpose.msra.mxu0 0
    %1194 = vmatprep.subr.bf16.mxu0 0
    %1195 = vmatpush2.bf16.xpose.msra.mxu0 0
    %1196 = vmatprep.subr.bf16.mxu0 0
    %1197 = vmatpush2.bf16.xpose.msra.mxu0 0
    %1198 = vmatprep.subr.bf16.mxu0 0
    %1199 = vmatpush2.bf16.xpose.msra.mxu0 0
    %1200 = vmatprep.mubr.bf16.mxu0 0
    %1201 = vmatmul.mubr.bf16.gmra.mxu0 %v851
    %v1202 = vpop.f32.mrf.mxu0
    %v1203 = vadd.f32 0.0, %v1202
    %v1204 = vpop.f32.mrf.mxu0
    %v1205 = vpop.f32.mrf.mxu0
    %v1206 = vpop.f32.mrf.mxu0
    %1207 = vdwg.mxu0
    %1208 = vmatprep.subr.bf16.mxu0 0
    %1209 = vmatpush1.bf16.xpose.msra.mxu0 0
    %1210 = vmatprep.subr.bf16.mxu0 0
    %1211 = vmatpush1.bf16.xpose.msra.mxu0 0
    %1212 = vmatprep.subr.bf16.mxu0 0
    %1213 = vmatpush1.bf16.xpose.msra.mxu0 0
    %1214 = vmatprep.subr.bf16.mxu0 0
    %1215 = vmatpush1.bf16.xpose.msra.mxu0 0
    %1216 = vmatprep.subr.bf16.mxu0 0
    %1217 = vmatpush1.bf16.xpose.msra.mxu0 0
    %1218 = vmatprep.subr.bf16.mxu0 0
    %1219 = vmatpush1.bf16.xpose.msra.mxu0 0
    %1220 = vmatprep.subr.bf16.mxu0 0
    %1221 = vmatpush1.bf16.xpose.msra.mxu0 %v499
    %1222 = vmatprep.subr.bf16.mxu0 0
    %1223 = vmatpush1.bf16.xpose.msra.mxu0 %v496
    %1224 = vmatprep.subr.bf16.mxu0 0
    %1225 = vmatpush2.bf16.xpose.msra.mxu0 0
    %1226 = vmatprep.subr.bf16.mxu0 0
    %1227 = vmatpush2.bf16.xpose.msra.mxu0 0
    %1228 = vmatprep.subr.bf16.mxu0 0
    %1229 = vmatpush2.bf16.xpose.msra.mxu0 0
    %1230 = vmatprep.subr.bf16.mxu0 0
    %1231 = vmatpush2.bf16.xpose.msra.mxu0 0
    %1232 = vmatprep.subr.bf16.mxu0 0
    %1233 = vmatpush2.bf16.xpose.msra.mxu0 0
    %1234 = vmatprep.subr.bf16.mxu0 0
    %1235 = vmatpush2.bf16.xpose.msra.mxu0 0
    %1236 = vmatprep.subr.bf16.mxu0 0
    %1237 = vmatpush2.bf16.xpose.msra.mxu0 0
    %1238 = vmatprep.subr.bf16.mxu0 0
    %1239 = vmatpush2.bf16.xpose.msra.mxu0 0
    %1240 = vmatprep.mubr.bf16.mxu0 0
    %1241 = vmatmul.mubr.bf16.gmra.mxu0 %v851
    %v1242 = vpop.f32.mrf.mxu0
    %v1243 = vadd.f32 0.0, %v1242
    %v1244 = vpop.f32.mrf.mxu0
    %v1245 = vpop.f32.mrf.mxu0
    %v1246 = vpop.f32.mrf.mxu0
    %1247 = vdwg.mxu0
    %v1248 = vmul.f32 %v1163, %v1163
    %v1249 = vsel %vm216, %v1248, 0.0
    %1250 = vadd.xlane.f32.xlu0 %v1249
    %v1251 = vpop.xlane.xlu0 %1250
    %v1252 = vmax.f32 %v1251, 1e-24
    %v1253 = vrsqrt.pop %v1252
    %v1254 = vmul.f32 %v1253, 0.17677669
    %v1255 = vmul.f32 %v1163, %v1254
    %v1256 = vmul.f32 %v1203, %v1203
    %v1257 = vsel %vm216, %v1256, 0.0
    %1258 = vadd.xlane.f32.xlu0 %v1257
    %v1259 = vpop.xlane.xlu0 %1258
    %v1260 = vmax.f32 %v1259, 1e-24
    %v1261 = vrsqrt.pop %v1260
    %v1262 = vmul.f32 %v1203, %v1261
    %v1264 = vsel %vm216, %v1255, 0
    %v1267 = vsel %vm216, %v1262, 0
    %1269 = vmatprep.subr.mxu0 0.0
    %1270 = vmatpush1.xpose.msra.mxu0 0.0
    %1271 = vmatprep.subr.mxu0 0.0
    %1272 = vmatpush1.xpose.msra.mxu0 0.0
    %1273 = vmatprep.subr.mxu0 0.0
    %1274 = vmatpush1.xpose.msra.mxu0 0.0
    %1275 = vmatprep.subr.mxu0 0.0
    %1276 = vmatpush1.xpose.msra.mxu0 0.0
    %1277 = vmatprep.subr.mxu0 0.0
    %1278 = vmatpush1.xpose.msra.mxu0 0.0
    %1279 = vmatprep.subr.mxu0 0.0
    %1280 = vmatpush1.xpose.msra.mxu0 0.0
    %1281 = vmatprep.subr.mxu0 0.0
    %1282 = vmatpush1.xpose.msra.mxu0 0.0
    %1283 = vmatprep.subr.mxu0 0.0
    %1284 = vmatpush1.xpose.msra.mxu0 0.0
    %1285 = vmatprep.subr.mxu0 0.0
    %1286 = vmatpush1.xpose.msra.mxu0 0.0
    %1287 = vmatprep.subr.mxu0 0.0
    %1288 = vmatpush1.xpose.msra.mxu0 0.0
    %1289 = vmatprep.subr.mxu0 0.0
    %1290 = vmatpush1.xpose.msra.mxu0 0.0
    %1291 = vmatprep.subr.mxu0 0.0
    %1292 = vmatpush1.xpose.msra.mxu0 0.0
    %1293 = vmatprep.subr.mxu0 0.0
    %1294 = vmatpush1.xpose.msra.mxu0 0.0
    %1295 = vmatprep.subr.mxu0 0.0
    %1296 = vmatpush1.xpose.msra.mxu0 0.0
    %1297 = vmatprep.subr.mxu0 0.0
    %1298 = vmatpush1.xpose.msra.mxu0 0.0
    %1299 = vmatprep.subr.mxu0 0.0
    %1300 = vmatpush1.xpose.msra.mxu0 %v1267
    %1301 = vmatprep.subr.mxu0 0.0
    %1302 = vmatpush2.xpose.msra.mxu0 0.0
    %1303 = vmatprep.subr.mxu0 0.0
    %1304 = vmatpush2.xpose.msra.mxu0 0.0
    %1305 = vmatprep.subr.mxu0 0.0
    %1306 = vmatpush2.xpose.msra.mxu0 0.0
    %1307 = vmatprep.subr.mxu0 0.0
    %1308 = vmatpush2.xpose.msra.mxu0 0.0
    %1309 = vmatprep.subr.mxu0 0.0
    %1310 = vmatpush2.xpose.msra.mxu0 0.0
    %1311 = vmatprep.subr.mxu0 0.0
    %1312 = vmatpush2.xpose.msra.mxu0 0.0
    %1313 = vmatprep.subr.mxu0 0.0
    %1314 = vmatpush2.xpose.msra.mxu0 0.0
    %1315 = vmatprep.subr.mxu0 0.0
    %1316 = vmatpush2.xpose.msra.mxu0 0.0
    %1317 = vmatprep.subr.mxu0 0.0
    %1318 = vmatpush2.xpose.msra.mxu0 0.0
    %1319 = vmatprep.subr.mxu0 0.0
    %1320 = vmatpush2.xpose.msra.mxu0 0.0
    %1321 = vmatprep.subr.mxu0 0.0
    %1322 = vmatpush2.xpose.msra.mxu0 0.0
    %1323 = vmatprep.subr.mxu0 0.0
    %1324 = vmatpush2.xpose.msra.mxu0 0.0
    %1325 = vmatprep.subr.mxu0 0.0
    %1326 = vmatpush2.xpose.msra.mxu0 0.0
    %1327 = vmatprep.subr.mxu0 0.0
    %1328 = vmatpush2.xpose.msra.mxu0 0.0
    %1329 = vmatprep.subr.mxu0 0.0
    %1330 = vmatpush2.xpose.msra.mxu0 0.0
    %1331 = vmatprep.subr.mxu0 0.0
    %1332 = vmatpush2.xpose.msra.mxu0 0.0
    %1333 = vmatprep.mubr.f32.mxu0 0.0
    %1334 = vmatmul.mubr.f32.gmra.mxu0 %v1264
    %v1335 = vpop.f32.mrf.mxu0
    %v1336 = vadd.f32 0.0, %v1335
    %v1337 = vpop.f32.mrf.mxu0
    %1338 = vdwg.mxu0
    %v1339 = vmul.f32 %v1336, 1.442695
    %v1340 = vpow.pop %v1339
    %v1341 = vsel %vm309, %v1340, 0.0
    %1342 = vadd.xlane.f32.xlu0 %v1341
    %v1343 = vpop.xlane.xlu0 %1342
    %v1344 = vrcp.pop %v1343
    %v1345 = vmul.f32 %v1340, %v1344
    %v1346 = vpack.c.bf16 %v1345, %v1345
    %v1347 = vpack.c.bf16 %v1243, %v1243
    %v1349 = vsel %vm309, %v1346, 0
    %v1352 = vsel %vm320, %v1347, 0
    %1354 = vmatprep.subr.bf16.mxu0 0
    %1355 = vmatpush1.bf16.msra.mxu0 0
    %1356 = vmatprep.subr.bf16.mxu0 0
    %1357 = vmatpush1.bf16.msra.mxu0 0
    %1358 = vmatprep.subr.bf16.mxu0 0
    %1359 = vmatpush1.bf16.msra.mxu0 0
    %1360 = vmatprep.subr.bf16.mxu0 0
    %1361 = vmatpush1.bf16.msra.mxu0 0
    %1362 = vmatprep.subr.bf16.mxu0 0
    %1363 = vmatpush1.bf16.msra.mxu0 0
    %1364 = vmatprep.subr.bf16.mxu0 0
    %1365 = vmatpush1.bf16.msra.mxu0 0
    %1366 = vmatprep.subr.bf16.mxu0 0
    %1367 = vmatpush1.bf16.msra.mxu0 0
    %1368 = vmatprep.subr.bf16.mxu0 0
    %1369 = vmatpush1.bf16.msra.mxu0 %v1352
    %1370 = vmatprep.subr.bf16.mxu0 0
    %1371 = vmatpush2.bf16.msra.mxu0 0
    %1372 = vmatprep.subr.bf16.mxu0 0
    %1373 = vmatpush2.bf16.msra.mxu0 0
    %1374 = vmatprep.subr.bf16.mxu0 0
    %1375 = vmatpush2.bf16.msra.mxu0 0
    %1376 = vmatprep.subr.bf16.mxu0 0
    %1377 = vmatpush2.bf16.msra.mxu0 0
    %1378 = vmatprep.subr.bf16.mxu0 0
    %1379 = vmatpush2.bf16.msra.mxu0 0
    %1380 = vmatprep.subr.bf16.mxu0 0
    %1381 = vmatpush2.bf16.msra.mxu0 0
    %1382 = vmatprep.subr.bf16.mxu0 0
    %1383 = vmatpush2.bf16.msra.mxu0 0
    %1384 = vmatprep.subr.bf16.mxu0 0
    %1385 = vmatpush2.bf16.msra.mxu0 0
    %1386 = vmatprep.mubr.bf16.mxu0 0
    %1387 = vmatmul.mubr.bf16.gmra.mxu0 %v1349
    %v1388 = vpop.f32.mrf.mxu0
    %v1389 = vadd.f32 0.0, %v1388
    %v1390 = vpop.f32.mrf.mxu0
    %v1391 = vpop.f32.mrf.mxu0
    %v1392 = vpop.f32.mrf.mxu0
    %1393 = vdwg.mxu0
    %v1394 = vld [vmem:[%s687] sm:$0xf]
    %v1395 = vld [vmem:[%s687 + $0x4] sm:$0xf]
    %v1396 = vld [vmem:[%s687 + $0x8] sm:$0xf]
    %v1397 = vld [vmem:[%s687 + $0xc] sm:$0xf]
    %v1398 = vld [vmem:[%s687 + $0x10] sm:$0xf]
    %v1399 = vld [vmem:[%s687 + $0x14] sm:$0xf]
    %v1400 = vld [vmem:[%s687 + $0x18] sm:$0xf]
    %v1401 = vld [vmem:[%s687 + $0x1c] sm:$0xf]
    %v1402 = vpack.c.bf16 %v1389, %v1389
    %v1411 = vunpack.c.l.b16 %v1394
    %v1412 = vunpack.c.l.b16 %v1395
    %v1413 = vunpack.c.l.b16 %v1396
    %v1414 = vunpack.c.l.b16 %v1397
    %v1415 = vunpack.c.l.b16 %v1398
    %v1416 = vunpack.c.l.b16 %v1399
    %v1417 = vunpack.c.l.b16 %v1400
    %v1418 = vunpack.c.l.b16 %v1401
    %v1419 = vpack.c.b16 %v1412, %v1411
    %v1420 = vpack.c.b16 %v1414, %v1413
    %v1421 = vpack.c.b16 %v1416, %v1415
    %v1422 = vpack.c.b16 %v1418, %v1417
    %v1424 = vsel %vm216, %v1402, 0
    %v1427 = vsel %vm216, %v1419, 0
    %v1430 = vsel %vm216, %v1420, 0
    %v1433 = vsel %vm216, %v1421, 0
    %v1436 = vsel %vm216, %v1422, 0
    %1438 = vmatprep.subr.bf16.mxu0 0
    %1439 = vmatpush1.bf16.xpose.msra.mxu0 0
    %1440 = vmatprep.subr.bf16.mxu0 0
    %1441 = vmatpush1.bf16.xpose.msra.mxu0 0
    %1442 = vmatprep.subr.bf16.mxu0 0
    %1443 = vmatpush1.bf16.xpose.msra.mxu0 0
    %1444 = vmatprep.subr.bf16.mxu0 0
    %1445 = vmatpush1.bf16.xpose.msra.mxu0 0
    %1446 = vmatprep.subr.bf16.mxu0 0
    %1447 = vmatpush1.bf16.xpose.msra.mxu0 %v1436
    %1448 = vmatprep.subr.bf16.mxu0 0
    %1449 = vmatpush1.bf16.xpose.msra.mxu0 %v1433
    %1450 = vmatprep.subr.bf16.mxu0 0
    %1451 = vmatpush1.bf16.xpose.msra.mxu0 %v1430
    %1452 = vmatprep.subr.bf16.mxu0 0
    %1453 = vmatpush1.bf16.xpose.msra.mxu0 %v1427
    %1454 = vmatprep.subr.bf16.mxu0 0
    %1455 = vmatpush2.bf16.xpose.msra.mxu0 0
    %1456 = vmatprep.subr.bf16.mxu0 0
    %1457 = vmatpush2.bf16.xpose.msra.mxu0 0
    %1458 = vmatprep.subr.bf16.mxu0 0
    %1459 = vmatpush2.bf16.xpose.msra.mxu0 0
    %1460 = vmatprep.subr.bf16.mxu0 0
    %1461 = vmatpush2.bf16.xpose.msra.mxu0 0
    %1462 = vmatprep.subr.bf16.mxu0 0
    %1463 = vmatpush2.bf16.xpose.msra.mxu0 0
    %1464 = vmatprep.subr.bf16.mxu0 0
    %1465 = vmatpush2.bf16.xpose.msra.mxu0 0
    %1466 = vmatprep.subr.bf16.mxu0 0
    %1467 = vmatpush2.bf16.xpose.msra.mxu0 0
    %1468 = vmatprep.subr.bf16.mxu0 0
    %1469 = vmatpush2.bf16.xpose.msra.mxu0 0
    %1470 = vmatprep.mubr.bf16.mxu0 0
    %1471 = vmatmul.mubr.bf16.gmra.mxu0 %v1424
    %v1472 = vpop.f32.mrf.mxu0
    %v1473 = vadd.f32 0.0, %v1472
    %v1474 = vpop.f32.mrf.mxu0
    %v1475 = vpop.f32.mrf.mxu0
    %v1476 = vpop.f32.mrf.mxu0
    %1477 = vdwg.mxu0
    %v1486 = vunpack.c.l.b16 %v1119
    %v1487 = vunpack.c.l.b16 %v1120
    %v1488 = vunpack.c.l.b16 %v1121
    %v1489 = vunpack.c.l.b16 %v1122
    %v1490 = vunpack.c.l.b16 %v1123
    %v1491 = vunpack.c.l.b16 %v1124
    %v1492 = vunpack.c.l.b16 %v1125
    %v1493 = vunpack.c.l.b16 %v1126
    %v1494 = vpack.c.b16 %v1487, %v1486
    %v1495 = vpack.c.b16 %v1489, %v1488
    %v1496 = vpack.c.b16 %v1491, %v1490
    %v1497 = vpack.c.b16 %v1493, %v1492
    %v1499 = vsel %vm216, %v1127, 0
    %v1502 = vsel %vm216, %v1494, 0
    %v1505 = vsel %vm216, %v1495, 0
    %v1508 = vsel %vm216, %v1496, 0
    %v1511 = vsel %vm216, %v1497, 0
    %1513 = vmatprep.subr.bf16.mxu0 0
    %1514 = vmatpush1.bf16.xpose.msra.mxu0 0
    %1515 = vmatprep.subr.bf16.mxu0 0
    %1516 = vmatpush1.bf16.xpose.msra.mxu0 0
    %1517 = vmatprep.subr.bf16.mxu0 0
    %1518 = vmatpush1.bf16.xpose.msra.mxu0 0
    %1519 = vmatprep.subr.bf16.mxu0 0
    %1520 = vmatpush1.bf16.xpose.msra.mxu0 0
    %1521 = vmatprep.subr.bf16.mxu0 0
    %1522 = vmatpush1.bf16.xpose.msra.mxu0 %v1511
    %1523 = vmatprep.subr.bf16.mxu0 0
    %1524 = vmatpush1.bf16.xpose.msra.mxu0 %v1508
    %1525 = vmatprep.subr.bf16.mxu0 0
    %1526 = vmatpush1.bf16.xpose.msra.mxu0 %v1505
    %1527 = vmatprep.subr.bf16.mxu0 0
    %1528 = vmatpush1.bf16.xpose.msra.mxu0 %v1502
    %1529 = vmatprep.subr.bf16.mxu0 0
    %1530 = vmatpush2.bf16.xpose.msra.mxu0 0
    %1531 = vmatprep.subr.bf16.mxu0 0
    %1532 = vmatpush2.bf16.xpose.msra.mxu0 0
    %1533 = vmatprep.subr.bf16.mxu0 0
    %1534 = vmatpush2.bf16.xpose.msra.mxu0 0
    %1535 = vmatprep.subr.bf16.mxu0 0
    %1536 = vmatpush2.bf16.xpose.msra.mxu0 0
    %1537 = vmatprep.subr.bf16.mxu0 0
    %1538 = vmatpush2.bf16.xpose.msra.mxu0 0
    %1539 = vmatprep.subr.bf16.mxu0 0
    %1540 = vmatpush2.bf16.xpose.msra.mxu0 0
    %1541 = vmatprep.subr.bf16.mxu0 0
    %1542 = vmatpush2.bf16.xpose.msra.mxu0 0
    %1543 = vmatprep.subr.bf16.mxu0 0
    %1544 = vmatpush2.bf16.xpose.msra.mxu0 0
    %1545 = vmatprep.mubr.bf16.mxu0 0
    %1546 = vmatmul.mubr.bf16.gmra.mxu0 %v1499
    %v1547 = vpop.f32.mrf.mxu0
    %v1548 = vadd.f32 %v1473, %v1547
    %v1549 = vpop.f32.mrf.mxu0
    %v1550 = vpop.f32.mrf.mxu0
    %v1551 = vpop.f32.mrf.mxu0
    %1552 = vdwg.mxu0
    %1553 = vst.msk [vmem:[#allocation2 + $0x8] sm:$0xff] %vm53, %v1548
    // Predicated region
    $region14: #{attention_forward.1} parent=1 // pred_check
      _
    $region15: #{attention_forward.1} parent=1 // pred_check_branch
      %1555 = sbr.rel (0) target = $region17
    $region16: #{attention_forward.1} parent=1 // pred_region
      %s1557 = ssub.s32 256, 256
      %1558 = vsyncadd [#allocation3], %s1557
      %s1559 = sshll.u32 [#allocation2], 4
      %s1560 = int_to_ptr.vmem [resolvable:$true] %s1559
      %1565 = dma.vmem_to_hbm [thread:$0]  %s1560, 256, %s3, [#allocation3], 128, 128, 8
    $region17: #{attention_forward.1} parent=1 // pred_fallthru
      _
    // Predicated region
    $region18: #{attention_forward.1} parent=1 // pred_check
      _
    $region19: #{attention_forward.1} parent=1 // pred_check_branch
      %1567 = sbr.rel (0) target = $region21
    $region20: #{attention_forward.1} parent=1 // pred_region
      %1568 = dma.done [#allocation3], 256
    $region21: #{attention_forward.1} parent=1 // pred_fallthru
      _
    %1569 = vsyncpa [#allocation3], 1

</llo_original>
